<compile_context>
chip_gen: v7x
topology: tpu7x:2x2x1
jax: 0.10.0
libtpu: 0.0.40
codegen_flags: <defaults>
</compile_context>

<pallas_src>
import functools

import jax
import jax.numpy as jnp
from jax.experimental import pallas as pl
from jax.experimental.pallas import tpu as pltpu

NEG_SLOPE = 0.2  # nn.LeakyReLU(negative_slope=0.2)


def scpa_kernel(x_ref, w1ab_ref, wk1_ref, wk2_ref, bk2_ref, wk3_ref, wk4_ref,
                w3_ref, o_ref, pad_ref, stk_ref, *, H, W):
    HW = H * W
    gw = wk2_ref.shape[0]
    mm_dtype = w1ab_ref.dtype

    x = x_ref[0]  # (C, HW) float32

    def lrelu(v):
        return jnp.where(v >= 0, v, NEG_SLOPE * v)

    def mm(w, a):
        # (M, K) @ (K, HW) on the MXU; optional bf16 operands, f32 accumulate.
        return jnp.dot(w.astype(mm_dtype), a.astype(mm_dtype),
                       preferred_element_type=jnp.float32)

    # Column-wrap validity masks (shape (1, HW)); dy boundaries are handled by
    # the zero halo rows in pad_ref, only dx = +-1 needs masking.
    col = jax.lax.broadcasted_iota(jnp.int32, (1, HW), 1) % W
    not_first_col = col != 0          # a left-shifted read is invalid at col 0
    not_last_col = col != (W - 1)     # a right-shifted read is invalid at col W-1

    # Zero the halo buffer once; every conv3x3 overwrites only the interior.
    pad_ref[...] = jnp.zeros_like(pad_ref)
    o0 = W + 1  # flat offset of pixel (0, 0) inside pad_ref

    taps = [(dy, dx) for dy in (-1, 0, 1) for dx in (-1, 0, 1)]

    def conv3x3(v, w9_ref):
        """3x3 same conv (cross-correlation), channel-major.

        v: (gw, HW) f32.  w9_ref: (gw, 9*gw) with columns ordered (ky, kx, cin).
        Returns (gw, HW) f32.
        """
        pad_ref[:, pl.ds(o0, HW)] = v
        for t, (dy, dx) in enumerate(taps):
            tap = pad_ref[:, pl.ds(o0 + dy * W + dx, HW)]
            if dx == 1:
                tap = jnp.where(not_last_col, tap, 0.0)
            elif dx == -1:
                tap = jnp.where(not_first_col, tap, 0.0)
            stk_ref[pl.ds(t * gw, gw), :] = tap
        # Single wide-K matmul over all 9 taps: (gw, 9*gw) @ (9*gw, HW).
        return mm(w9_ref[...], stk_ref[...])

    # conv1_a / conv1_b fused: (2*gw, C) @ (C, HW), then LeakyReLU.
    ab = lrelu(mm(w1ab_ref[...], x))
    out_a = ab[:gw]
    out_b = ab[gw:]

    # Branch a: k1 (3x3, no bias) + LeakyReLU.
    out_a = lrelu(conv3x3(out_a, wk1_ref))

    # Branch b: PACnv = k4( k3(x) * sigmoid(k2(x)) ), then LeakyReLU.
    z = mm(wk2_ref[...], out_b) + bk2_ref[...]        # bias broadcasts over HW
    y = 1.0 / (1.0 + jnp.exp(-z))                     # sigmoid (exact)
    t = conv3x3(out_b, wk3_ref) * y
    out_b = lrelu(conv3x3(t, wk4_ref))

    # conv3 over concat([out_a, out_b]) + residual.  Reuse stk_ref rows as the
    # concat buffer so the contraction is one (C, 2*gw) @ (2*gw, HW) matmul.
    stk_ref[pl.ds(0, gw), :] = out_a
    stk_ref[pl.ds(gw, gw), :] = out_b
    out = mm(w3_ref[...], stk_ref[pl.ds(0, 2 * gw), :]) + x
    o_ref[0] = out.astype(o_ref.dtype)


def scpa_pallas(x_nchw, params, *, mm_dtype=jnp.float32,
                vmem_limit_bytes=32 * 1024 * 1024):
    N, C, H, W = x_nchw.shape
    HW = H * W
    gw = params["w_k1"].shape[0]

    # Channel-major: (N, C, HW).  No transpose needed in or out.
    x = x_nchw.reshape(N, C, HW).astype(jnp.float32)

    def prep1x1(w):  # (O, I, 1, 1) -> (O, I)
        return w[:, :, 0, 0]

    def prep3x3(w):  # (O, I, 3, 3) -> (O, 9*I), columns ordered (ky, kx, i)
        O, I, _, _ = w.shape
        return jnp.transpose(w, (0, 2, 3, 1)).reshape(O, 9 * I)

    w1ab = jnp.concatenate([prep1x1(params["w_conv1_a"]),
                            prep1x1(params["w_conv1_b"])],
                           axis=0).astype(mm_dtype)          # (2*gw, C)
    wk1 = prep3x3(params["w_k1"]).astype(mm_dtype)           # (gw, 9*gw)
    wk2 = prep1x1(params["w_k2"]).astype(mm_dtype)           # (gw, gw)
    bk2 = params["b_k2"].reshape(gw, 1).astype(jnp.float32)  # (gw, 1)
    wk3 = prep3x3(params["w_k3"]).astype(mm_dtype)           # (gw, 9*gw)
    wk4 = prep3x3(params["w_k4"]).astype(mm_dtype)           # (gw, 9*gw)
    w3 = prep1x1(params["w_conv3"]).astype(mm_dtype)         # (C, 2*gw)

    def full(a):
        return pl.BlockSpec(a.shape, lambda n, _nd=a.ndim: (0,) * _nd)

    kernel = functools.partial(scpa_kernel, H=H, W=W)

    out = pl.pallas_call(
        kernel,
        out_shape=jax.ShapeDtypeStruct((N, C, HW), jnp.float32),
        grid_spec=pltpu.PrefetchScalarGridSpec(
            num_scalar_prefetch=0,
            grid=(N,),
            in_specs=[
                pl.BlockSpec((1, C, HW), lambda n: (n, 0, 0)),
                full(w1ab), full(wk1), full(wk2), full(bk2),
                full(wk3), full(wk4), full(w3),
            ],
            out_specs=pl.BlockSpec((1, C, HW), lambda n: (n, 0, 0)),
            scratch_shapes=[
                pltpu.VMEM((gw, HW + 2 * W + 2), jnp.float32),  # halo buffer
                pltpu.VMEM((9 * gw, HW), jnp.float32),          # tap stack
            ],
        ),
        compiler_params=pltpu.CompilerParams(
            dimension_semantics=("parallel",),
            vmem_limit_bytes=vmem_limit_bytes),
    )(x, w1ab, wk1, wk2, bk2, wk3, wk4, w3)

    return out.reshape(N, C, H, W)


# ---------------- pure-JAX reference (for correctness check) ----------------
def _conv2d(x, w, b=None, pad=0):
    out = jax.lax.conv_general_dilated(
        x, w, window_strides=(1, 1), padding=[(pad, pad), (pad, pad)],
        dimension_numbers=("NCHW", "OIHW", "NCHW"))
    if b is not None:
        out = out + b[None, :, None, None]
    return out


def _lrelu(v):
    return jnp.where(v >= 0, v, NEG_SLOPE * v)


def scpa_ref(x, p):
    out_a = _lrelu(_conv2d(x, p["w_conv1_a"]))
    out_b = _lrelu(_conv2d(x, p["w_conv1_b"]))
    out_a = _lrelu(_conv2d(out_a, p["w_k1"], pad=1))
    y = jax.nn.sigmoid(_conv2d(out_b, p["w_k2"], p["b_k2"]))
    out_b = _conv2d(_conv2d(out_b, p["w_k3"], pad=1) * y, p["w_k4"], pad=1)
    out_b = _lrelu(out_b)
    out = _conv2d(jnp.concatenate([out_a, out_b], axis=1), p["w_conv3"])
    return out + x


if __name__ == "__main__":
    key = jax.random.PRNGKey(0)
    N, nf, H, W = 2, 4, 16, 16
    reduction = 2
    gw = nf // reduction

    ks = jax.random.split(key, 9)
    params = {
        "w_conv1_a": 0.2 * jax.random.normal(ks[0], (gw, nf, 1, 1), jnp.float32),
        "w_conv1_b": 0.2 * jax.random.normal(ks[1], (gw, nf, 1, 1), jnp.float32),
        "w_k1":      0.2 * jax.random.normal(ks[2], (gw, gw, 3, 3), jnp.float32),
        "w_k2":      0.2 * jax.random.normal(ks[3], (gw, gw, 1, 1), jnp.float32),
        "b_k2":      0.1 * jax.random.normal(ks[4], (gw,), jnp.float32),
        "w_k3":      0.2 * jax.random.normal(ks[5], (gw, gw, 3, 3), jnp.float32),
        "w_k4":      0.2 * jax.random.normal(ks[6], (gw, gw, 3, 3), jnp.float32),
        "w_conv3":   0.2 * jax.random.normal(ks[7], (nf, gw * reduction, 1, 1),
                                             jnp.float32),
    }
    x = jax.random.normal(ks[8], (N, nf, H, W), jnp.float32)

    ref = jax.block_until_ready(scpa_ref(x, params))

    # f32 matmul operands: tight correctness check.
    out = jax.block_until_ready(scpa_pallas(x, params))
    err = float(jnp.max(jnp.abs(out - ref)))
    assert out.shape == x.shape and err < 5e-4, f"f32 max abs err = {err}"

    # bf16 matmul operands (v6e/v7x fast path), f32 accumulation: loose sanity
    # check only (bf16 rounding through the conv chain).
    out_bf16 = jax.block_until_ready(
        scpa_pallas(x, params, mm_dtype=jnp.bfloat16))
    err_bf16 = float(jnp.max(jnp.abs(out_bf16 - ref)))
    assert out_bf16.shape == x.shape and err_bf16 < 0.5, \
        f"bf16 max abs err = {err_bf16}"

    print("KERNEL_OK")
</pallas_src>

<mosaic_0001>
module attributes {stable_mosaic.version = 11 : i64} {
  func.func @scpa_kernel(%arg0: i32, %arg1: memref<1x4x256xf32, #tpu.memory_space<vmem>>, %arg2: memref<4x4xf32, #tpu.memory_space<vmem>>, %arg3: memref<2x18xf32, #tpu.memory_space<vmem>>, %arg4: memref<2x2xf32, #tpu.memory_space<vmem>>, %arg5: memref<2x1xf32, #tpu.memory_space<vmem>>, %arg6: memref<2x18xf32, #tpu.memory_space<vmem>>, %arg7: memref<2x18xf32, #tpu.memory_space<vmem>>, %arg8: memref<4x4xf32, #tpu.memory_space<vmem>>, %arg9: memref<1x4x256xf32, #tpu.memory_space<vmem>>, %arg10: memref<2x290xf32, #tpu.memory_space<vmem>>, %arg11: memref<18x256xf32, #tpu.memory_space<vmem>>) attributes {dimension_semantics = [#tpu.dimension_semantics<parallel>], iteration_bounds = array<i64: 2>, scalar_prefetch = 0 : i64, scratch_operands = 2 : i64, tpu.core_type = #tpu.core_type<tc>, window_params = [{transform_indices = @transform_0, window_bounds = array<i64: 1, 4, 256>}, {pipeline_mode = #tpu.pipeline_mode<synchronous>, transform_indices = @transform_1, window_bounds = array<i64: 4, 4>}, {pipeline_mode = #tpu.pipeline_mode<synchronous>, transform_indices = @transform_2, window_bounds = array<i64: 2, 18>}, {pipeline_mode = #tpu.pipeline_mode<synchronous>, transform_indices = @transform_3, window_bounds = array<i64: 2, 2>}, {pipeline_mode = #tpu.pipeline_mode<synchronous>, transform_indices = @transform_4, window_bounds = array<i64: 2, 1>}, {pipeline_mode = #tpu.pipeline_mode<synchronous>, transform_indices = @transform_5, window_bounds = array<i64: 2, 18>}, {pipeline_mode = #tpu.pipeline_mode<synchronous>, transform_indices = @transform_6, window_bounds = array<i64: 2, 18>}, {pipeline_mode = #tpu.pipeline_mode<synchronous>, transform_indices = @transform_7, window_bounds = array<i64: 4, 4>}, {transform_indices = @transform_8, window_bounds = array<i64: 1, 4, 256>}]} {
    %c0 = arith.constant 0 : index
    %c0_0 = arith.constant 0 : index
    %c0_1 = arith.constant 0 : index
    %0 = vector.load %arg1[%c0, %c0_0, %c0_1] : memref<1x4x256xf32, #tpu.memory_space<vmem>>, vector<1x4x256xf32>
    %1 = vector.shape_cast %0 : vector<1x4x256xf32> to vector<4x256xf32>
    %2 = tpu.iota {dimensions = array<i32: 1>} : vector<1x256xi32>
    %c16_i32 = arith.constant 16 : i32
    %c0_i32 = arith.constant 0 : i32
    %3 = arith.cmpi eq, %c16_i32, %c0_i32 : i32
    %c1_i32 = arith.constant 1 : i32
    %4 = arith.select %3, %c1_i32, %c16_i32 : i32
    %5 = vector.broadcast %4 : i32 to vector<1x256xi32>
    %6 = arith.remsi %2, %5 : vector<1x256xi32>
    %c0_i32_2 = arith.constant 0 : i32
    %7 = vector.broadcast %c0_i32_2 : i32 to vector<1x256xi32>
    %8 = arith.cmpi ne, %6, %7 : vector<1x256xi32>
    %c0_i32_3 = arith.constant 0 : i32
    %9 = vector.broadcast %c0_i32_3 : i32 to vector<1x256xi32>
    %10 = arith.cmpi slt, %6, %9 : vector<1x256xi32>
    %c0_i32_4 = arith.constant 0 : i32
    %11 = arith.cmpi slt, %4, %c0_i32_4 : i32
    %12 = vector.broadcast %11 : i1 to vector<1x256xi1>
    %13 = vector.broadcast %12 : vector<1x256xi1> to vector<1x256xi1>
    %14 = arith.xori %10, %13 : vector<1x256xi1>
    %15 = arith.andi %14, %8 : vector<1x256xi1>
    %16 = vector.broadcast %4 : i32 to vector<1x256xi32>
    %17 = arith.addi %6, %16 : vector<1x256xi32>
    %18 = arith.select %15, %17, %6 : vector<1x256xi1>, vector<1x256xi32>
    %c0_i32_5 = arith.constant 0 : i32
    %19 = vector.broadcast %c0_i32_5 : i32 to vector<1x256xi32>
    %20 = arith.cmpi ne, %18, %19 : vector<1x256xi32>
    %c15_i32 = arith.constant 15 : i32
    %21 = vector.broadcast %c15_i32 : i32 to vector<1x256xi32>
    %22 = arith.cmpi ne, %18, %21 : vector<1x256xi32>
    %cst = arith.constant 0.000000e+00 : f32
    %23 = vector.broadcast %cst : f32 to vector<2x290xf32>
    %c0_6 = arith.constant 0 : index
    %c0_7 = arith.constant 0 : index
    %24 = vector.load %arg10[%c0_6, %c0_7] : memref<2x290xf32, #tpu.memory_space<vmem>>, vector<2x290xf32>
    tpu.vector_store %arg10[%c0_6, %c0_7], %23 {strides = array<i32>} : memref<2x290xf32, #tpu.memory_space<vmem>>, vector<2x290xf32>,
    %c0_8 = arith.constant 0 : index
    %c0_9 = arith.constant 0 : index
    %25 = vector.load %arg2[%c0_8, %c0_9] : memref<4x4xf32, #tpu.memory_space<vmem>>, vector<4x4xf32>
    %cst_10 = arith.constant dense<0.000000e+00> : vector<4x256xf32>
    %26 = tpu.matmul %25, %1, %cst_10 {dimension_numbers = #tpu.dot_dimension_numbers<[1], [0], [0], [1], [0, 0, 1, 1], [], []>} : vector<4x4xf32>, vector<4x256xf32>, vector<4x256xf32> -> vector<4x256xf32>
    %cst_11 = arith.constant 0.000000e+00 : f32
    %27 = vector.broadcast %cst_11 : f32 to vector<4x256xf32>
    %28 = arith.cmpf oge, %26, %27 : vector<4x256xf32>
    %cst_12 = arith.constant 2.000000e-01 : f32
    %29 = vector.broadcast %cst_12 : f32 to vector<4x256xf32>
    %30 = arith.mulf %29, %26 : vector<4x256xf32>
    %31 = arith.select %28, %26, %30 : vector<4x256xi1>, vector<4x256xf32>
    %32 = vector.extract_strided_slice %31 {offsets = [0, 0], sizes = [2, 256], strides = [1, 1]} : vector<4x256xf32> to vector<2x256xf32>
    %33 = vector.extract_strided_slice %31 {offsets = [2, 0], sizes = [2, 256], strides = [1, 1]} : vector<4x256xf32> to vector<2x256xf32>
    %c0_13 = arith.constant 0 : index
    %c17 = arith.constant 17 : index
    %34 = vector.load %arg10[%c0_13, %c17] : memref<2x290xf32, #tpu.memory_space<vmem>>, vector<2x256xf32>
    tpu.vector_store %arg10[%c0_13, %c17], %32 {strides = array<i32>} : memref<2x290xf32, #tpu.memory_space<vmem>>, vector<2x256xf32>,
    %c0_14 = arith.constant 0 : index
    %c0_15 = arith.constant 0 : index
    %35 = vector.load %arg10[%c0_14, %c0_15] : memref<2x290xf32, #tpu.memory_space<vmem>>, vector<2x256xf32>
    %cst_16 = arith.constant 0.000000e+00 : f32
    %36 = vector.shape_cast %20 : vector<1x256xi1> to vector<1x256xi1>
    %37 = vector.broadcast %36 : vector<1x256xi1> to vector<2x256xi1>
    %38 = vector.broadcast %cst_16 : f32 to vector<2x256xf32>
    %39 = arith.select %37, %35, %38 : vector<2x256xi1>, vector<2x256xf32>
    %c0_17 = arith.constant 0 : index
    %c0_18 = arith.constant 0 : index
    %40 = vector.load %arg11[%c0_17, %c0_18] : memref<18x256xf32, #tpu.memory_space<vmem>>, vector<2x256xf32>
    tpu.vector_store %arg11[%c0_17, %c0_18], %39 {strides = array<i32>} : memref<18x256xf32, #tpu.memory_space<vmem>>, vector<2x256xf32>,
    %c0_19 = arith.constant 0 : index
    %c1 = arith.constant 1 : index
    %41 = vector.load %arg10[%c0_19, %c1] : memref<2x290xf32, #tpu.memory_space<vmem>>, vector<2x256xf32>
    %c2 = arith.constant 2 : index
    %c0_20 = arith.constant 0 : index
    %42 = vector.load %arg11[%c2, %c0_20] : memref<18x256xf32, #tpu.memory_space<vmem>>, vector<2x256xf32>
    tpu.vector_store %arg11[%c2, %c0_20], %41 {strides = array<i32>} : memref<18x256xf32, #tpu.memory_space<vmem>>, vector<2x256xf32>,
    %c0_21 = arith.constant 0 : index
    %c2_22 = arith.constant 2 : index
    %43 = vector.load %arg10[%c0_21, %c2_22] : memref<2x290xf32, #tpu.memory_space<vmem>>, vector<2x256xf32>
    %cst_23 = arith.constant 0.000000e+00 : f32
    %44 = vector.shape_cast %22 : vector<1x256xi1> to vector<1x256xi1>
    %45 = vector.broadcast %44 : vector<1x256xi1> to vector<2x256xi1>
    %46 = vector.broadcast %cst_23 : f32 to vector<2x256xf32>
    %47 = arith.select %45, %43, %46 : vector<2x256xi1>, vector<2x256xf32>
    %c4 = arith.constant 4 : index
    %c0_24 = arith.constant 0 : index
    %48 = vector.load %arg11[%c4, %c0_24] : memref<18x256xf32, #tpu.memory_space<vmem>>, vector<2x256xf32>
    tpu.vector_store %arg11[%c4, %c0_24], %47 {strides = array<i32>} : memref<18x256xf32, #tpu.memory_space<vmem>>, vector<2x256xf32>,
    %c0_25 = arith.constant 0 : index
    %c16 = arith.constant 16 : index
    %49 = vector.load %arg10[%c0_25, %c16] : memref<2x290xf32, #tpu.memory_space<vmem>>, vector<2x256xf32>
    %cst_26 = arith.constant 0.000000e+00 : f32
    %50 = vector.shape_cast %20 : vector<1x256xi1> to vector<1x256xi1>
    %51 = vector.broadcast %50 : vector<1x256xi1> to vector<2x256xi1>
    %52 = vector.broadcast %cst_26 : f32 to vector<2x256xf32>
    %53 = arith.select %51, %49, %52 : vector<2x256xi1>, vector<2x256xf32>
    %c6 = arith.constant 6 : index
    %c0_27 = arith.constant 0 : index
    %54 = vector.load %arg11[%c6, %c0_27] : memref<18x256xf32, #tpu.memory_space<vmem>>, vector<2x256xf32>
    tpu.vector_store %arg11[%c6, %c0_27], %53 {strides = array<i32>} : memref<18x256xf32, #tpu.memory_space<vmem>>, vector<2x256xf32>,
    %c0_28 = arith.constant 0 : index
    %c17_29 = arith.constant 17 : index
    %55 = vector.load %arg10[%c0_28, %c17_29] : memref<2x290xf32, #tpu.memory_space<vmem>>, vector<2x256xf32>
    %c8 = arith.constant 8 : index
    %c0_30 = arith.constant 0 : index
    %56 = vector.load %arg11[%c8, %c0_30] : memref<18x256xf32, #tpu.memory_space<vmem>>, vector<2x256xf32>
    tpu.vector_store %arg11[%c8, %c0_30], %55 {strides = array<i32>} : memref<18x256xf32, #tpu.memory_space<vmem>>, vector<2x256xf32>,
    %c0_31 = arith.constant 0 : index
    %c18 = arith.constant 18 : index
    %57 = vector.load %arg10[%c0_31, %c18] : memref<2x290xf32, #tpu.memory_space<vmem>>, vector<2x256xf32>
    %cst_32 = arith.constant 0.000000e+00 : f32
    %58 = vector.shape_cast %22 : vector<1x256xi1> to vector<1x256xi1>
    %59 = vector.broadcast %58 : vector<1x256xi1> to vector<2x256xi1>
    %60 = vector.broadcast %cst_32 : f32 to vector<2x256xf32>
    %61 = arith.select %59, %57, %60 : vector<2x256xi1>, vector<2x256xf32>
    %c10 = arith.constant 10 : index
    %c0_33 = arith.constant 0 : index
    %62 = vector.load %arg11[%c10, %c0_33] : memref<18x256xf32, #tpu.memory_space<vmem>>, vector<2x256xf32>
    tpu.vector_store %arg11[%c10, %c0_33], %61 {strides = array<i32>} : memref<18x256xf32, #tpu.memory_space<vmem>>, vector<2x256xf32>,
    %c0_34 = arith.constant 0 : index
    %c32 = arith.constant 32 : index
    %63 = vector.load %arg10[%c0_34, %c32] : memref<2x290xf32, #tpu.memory_space<vmem>>, vector<2x256xf32>
    %cst_35 = arith.constant 0.000000e+00 : f32
    %64 = vector.shape_cast %20 : vector<1x256xi1> to vector<1x256xi1>
    %65 = vector.broadcast %64 : vector<1x256xi1> to vector<2x256xi1>
    %66 = vector.broadcast %cst_35 : f32 to vector<2x256xf32>
    %67 = arith.select %65, %63, %66 : vector<2x256xi1>, vector<2x256xf32>
    %c12 = arith.constant 12 : index
    %c0_36 = arith.constant 0 : index
    %68 = vector.load %arg11[%c12, %c0_36] : memref<18x256xf32, #tpu.memory_space<vmem>>, vector<2x256xf32>
    tpu.vector_store %arg11[%c12, %c0_36], %67 {strides = array<i32>} : memref<18x256xf32, #tpu.memory_space<vmem>>, vector<2x256xf32>,
    %c0_37 = arith.constant 0 : index
    %c33 = arith.constant 33 : index
    %69 = vector.load %arg10[%c0_37, %c33] : memref<2x290xf32, #tpu.memory_space<vmem>>, vector<2x256xf32>
    %c14 = arith.constant 14 : index
    %c0_38 = arith.constant 0 : index
    %70 = vector.load %arg11[%c14, %c0_38] : memref<18x256xf32, #tpu.memory_space<vmem>>, vector<2x256xf32>
    tpu.vector_store %arg11[%c14, %c0_38], %69 {strides = array<i32>} : memref<18x256xf32, #tpu.memory_space<vmem>>, vector<2x256xf32>,
    %c0_39 = arith.constant 0 : index
    %c34 = arith.constant 34 : index
    %71 = vector.load %arg10[%c0_39, %c34] : memref<2x290xf32, #tpu.memory_space<vmem>>, vector<2x256xf32>
    %cst_40 = arith.constant 0.000000e+00 : f32
    %72 = vector.shape_cast %22 : vector<1x256xi1> to vector<1x256xi1>
    %73 = vector.broadcast %72 : vector<1x256xi1> to vector<2x256xi1>
    %74 = vector.broadcast %cst_40 : f32 to vector<2x256xf32>
    %75 = arith.select %73, %71, %74 : vector<2x256xi1>, vector<2x256xf32>
    %c16_41 = arith.constant 16 : index
    %c0_42 = arith.constant 0 : index
    %76 = vector.load %arg11[%c16_41, %c0_42] : memref<18x256xf32, #tpu.memory_space<vmem>>, vector<2x256xf32>
    tpu.vector_store %arg11[%c16_41, %c0_42], %75 {strides = array<i32>} : memref<18x256xf32, #tpu.memory_space<vmem>>, vector<2x256xf32>,
    %c0_43 = arith.constant 0 : index
    %c0_44 = arith.constant 0 : index
    %77 = vector.load %arg3[%c0_43, %c0_44] : memref<2x18xf32, #tpu.memory_space<vmem>>, vector<2x18xf32>
    %c0_45 = arith.constant 0 : index
    %c0_46 = arith.constant 0 : index
    %78 = vector.load %arg11[%c0_45, %c0_46] : memref<18x256xf32, #tpu.memory_space<vmem>>, vector<18x256xf32>
    %cst_47 = arith.constant dense<0.000000e+00> : vector<2x256xf32>
    %79 = tpu.matmul %77, %78, %cst_47 {dimension_numbers = #tpu.dot_dimension_numbers<[1], [0], [0], [1], [0, 0, 1, 1], [], []>} : vector<2x18xf32>, vector<18x256xf32>, vector<2x256xf32> -> vector<2x256xf32>
    %cst_48 = arith.constant 0.000000e+00 : f32
    %80 = vector.broadcast %cst_48 : f32 to vector<2x256xf32>
    %81 = arith.cmpf oge, %79, %80 : vector<2x256xf32>
    %cst_49 = arith.constant 2.000000e-01 : f32
    %82 = vector.broadcast %cst_49 : f32 to vector<2x256xf32>
    %83 = arith.mulf %82, %79 : vector<2x256xf32>
    %84 = arith.select %81, %79, %83 : vector<2x256xi1>, vector<2x256xf32>
    %c0_50 = arith.constant 0 : index
    %c0_51 = arith.constant 0 : index
    %85 = vector.load %arg4[%c0_50, %c0_51] : memref<2x2xf32, #tpu.memory_space<vmem>>, vector<2x2xf32>
    %cst_52 = arith.constant dense<0.000000e+00> : vector<2x256xf32>
    %86 = tpu.matmul %85, %33, %cst_52 {dimension_numbers = #tpu.dot_dimension_numbers<[1], [0], [0], [1], [0, 0, 1, 1], [], []>} : vector<2x2xf32>, vector<2x256xf32>, vector<2x256xf32> -> vector<2x256xf32>
    %c0_53 = arith.constant 0 : index
    %c0_54 = arith.constant 0 : index
    %87 = vector.load %arg5[%c0_53, %c0_54] : memref<2x1xf32, #tpu.memory_space<vmem>>, vector<2x1xf32>
    %88 = vector.broadcast %87 : vector<2x1xf32> to vector<2x256xf32>
    %89 = arith.addf %86, %88 : vector<2x256xf32>
    %cst_55 = arith.constant 0.000000e+00 : f32
    %90 = vector.broadcast %cst_55 : f32 to vector<2x256xf32>
    %91 = arith.subf %90, %89 : vector<2x256xf32>
    %92 = math.exp %91 : vector<2x256xf32>
    %cst_56 = arith.constant 1.000000e+00 : f32
    %93 = vector.broadcast %cst_56 : f32 to vector<2x256xf32>
    %94 = arith.addf %93, %92 : vector<2x256xf32>
    %cst_57 = arith.constant 1.000000e+00 : f32
    %95 = vector.broadcast %cst_57 : f32 to vector<2x256xf32>
    %96 = arith.divf %95, %94 : vector<2x256xf32>
    %c0_58 = arith.constant 0 : index
    %c17_59 = arith.constant 17 : index
    %97 = vector.load %arg10[%c0_58, %c17_59] : memref<2x290xf32, #tpu.memory_space<vmem>>, vector<2x256xf32>
    tpu.vector_store %arg10[%c0_58, %c17_59], %33 {strides = array<i32>} : memref<2x290xf32, #tpu.memory_space<vmem>>, vector<2x256xf32>,
    %c0_60 = arith.constant 0 : index
    %c0_61 = arith.constant 0 : index
    %98 = vector.load %arg10[%c0_60, %c0_61] : memref<2x290xf32, #tpu.memory_space<vmem>>, vector<2x256xf32>
    %cst_62 = arith.constant 0.000000e+00 : f32
    %99 = vector.shape_cast %20 : vector<1x256xi1> to vector<1x256xi1>
    %100 = vector.broadcast %99 : vector<1x256xi1> to vector<2x256xi1>
    %101 = vector.broadcast %cst_62 : f32 to vector<2x256xf32>
    %102 = arith.select %100, %98, %101 : vector<2x256xi1>, vector<2x256xf32>
    %c0_63 = arith.constant 0 : index
    %c0_64 = arith.constant 0 : index
    %103 = vector.load %arg11[%c0_63, %c0_64] : memref<18x256xf32, #tpu.memory_space<vmem>>, vector<2x256xf32>
    tpu.vector_store %arg11[%c0_63, %c0_64], %102 {strides = array<i32>} : memref<18x256xf32, #tpu.memory_space<vmem>>, vector<2x256xf32>,
    %c0_65 = arith.constant 0 : index
    %c1_66 = arith.constant 1 : index
    %104 = vector.load %arg10[%c0_65, %c1_66] : memref<2x290xf32, #tpu.memory_space<vmem>>, vector<2x256xf32>
    %c2_67 = arith.constant 2 : index
    %c0_68 = arith.constant 0 : index
    %105 = vector.load %arg11[%c2_67, %c0_68] : memref<18x256xf32, #tpu.memory_space<vmem>>, vector<2x256xf32>
    tpu.vector_store %arg11[%c2_67, %c0_68], %104 {strides = array<i32>} : memref<18x256xf32, #tpu.memory_space<vmem>>, vector<2x256xf32>,
    %c0_69 = arith.constant 0 : index
    %c2_70 = arith.constant 2 : index
    %106 = vector.load %arg10[%c0_69, %c2_70] : memref<2x290xf32, #tpu.memory_space<vmem>>, vector<2x256xf32>
    %cst_71 = arith.constant 0.000000e+00 : f32
    %107 = vector.shape_cast %22 : vector<1x256xi1> to vector<1x256xi1>
    %108 = vector.broadcast %107 : vector<1x256xi1> to vector<2x256xi1>
    %109 = vector.broadcast %cst_71 : f32 to vector<2x256xf32>
    %110 = arith.select %108, %106, %109 : vector<2x256xi1>, vector<2x256xf32>
    %c4_72 = arith.constant 4 : index
    %c0_73 = arith.constant 0 : index
    %111 = vector.load %arg11[%c4_72, %c0_73] : memref<18x256xf32, #tpu.memory_space<vmem>>, vector<2x256xf32>
    tpu.vector_store %arg11[%c4_72, %c0_73], %110 {strides = array<i32>} : memref<18x256xf32, #tpu.memory_space<vmem>>, vector<2x256xf32>,
    %c0_74 = arith.constant 0 : index
    %c16_75 = arith.constant 16 : index
    %112 = vector.load %arg10[%c0_74, %c16_75] : memref<2x290xf32, #tpu.memory_space<vmem>>, vector<2x256xf32>
    %cst_76 = arith.constant 0.000000e+00 : f32
    %113 = vector.shape_cast %20 : vector<1x256xi1> to vector<1x256xi1>
    %114 = vector.broadcast %113 : vector<1x256xi1> to vector<2x256xi1>
    %115 = vector.broadcast %cst_76 : f32 to vector<2x256xf32>
    %116 = arith.select %114, %112, %115 : vector<2x256xi1>, vector<2x256xf32>
    %c6_77 = arith.constant 6 : index
    %c0_78 = arith.constant 0 : index
    %117 = vector.load %arg11[%c6_77, %c0_78] : memref<18x256xf32, #tpu.memory_space<vmem>>, vector<2x256xf32>
    tpu.vector_store %arg11[%c6_77, %c0_78], %116 {strides = array<i32>} : memref<18x256xf32, #tpu.memory_space<vmem>>, vector<2x256xf32>,
    %c0_79 = arith.constant 0 : index
    %c17_80 = arith.constant 17 : index
    %118 = vector.load %arg10[%c0_79, %c17_80] : memref<2x290xf32, #tpu.memory_space<vmem>>, vector<2x256xf32>
    %c8_81 = arith.constant 8 : index
    %c0_82 = arith.constant 0 : index
    %119 = vector.load %arg11[%c8_81, %c0_82] : memref<18x256xf32, #tpu.memory_space<vmem>>, vector<2x256xf32>
    tpu.vector_store %arg11[%c8_81, %c0_82], %118 {strides = array<i32>} : memref<18x256xf32, #tpu.memory_space<vmem>>, vector<2x256xf32>,
    %c0_83 = arith.constant 0 : index
    %c18_84 = arith.constant 18 : index
    %120 = vector.load %arg10[%c0_83, %c18_84] : memref<2x290xf32, #tpu.memory_space<vmem>>, vector<2x256xf32>
    %cst_85 = arith.constant 0.000000e+00 : f32
    %121 = vector.shape_cast %22 : vector<1x256xi1> to vector<1x256xi1>
    %122 = vector.broadcast %121 : vector<1x256xi1> to vector<2x256xi1>
    %123 = vector.broadcast %cst_85 : f32 to vector<2x256xf32>
    %124 = arith.select %122, %120, %123 : vector<2x256xi1>, vector<2x256xf32>
    %c10_86 = arith.constant 10 : index
    %c0_87 = arith.constant 0 : index
    %125 = vector.load %arg11[%c10_86, %c0_87] : memref<18x256xf32, #tpu.memory_space<vmem>>, vector<2x256xf32>
    tpu.vector_store %arg11[%c10_86, %c0_87], %124 {strides = array<i32>} : memref<18x256xf32, #tpu.memory_space<vmem>>, vector<2x256xf32>,
    %c0_88 = arith.constant 0 : index
    %c32_89 = arith.constant 32 : index
    %126 = vector.load %arg10[%c0_88, %c32_89] : memref<2x290xf32, #tpu.memory_space<vmem>>, vector<2x256xf32>
    %cst_90 = arith.constant 0.000000e+00 : f32
    %127 = vector.shape_cast %20 : vector<1x256xi1> to vector<1x256xi1>
    %128 = vector.broadcast %127 : vector<1x256xi1> to vector<2x256xi1>
    %129 = vector.broadcast %cst_90 : f32 to vector<2x256xf32>
    %130 = arith.select %128, %126, %129 : vector<2x256xi1>, vector<2x256xf32>
    %c12_91 = arith.constant 12 : index
    %c0_92 = arith.constant 0 : index
    %131 = vector.load %arg11[%c12_91, %c0_92] : memref<18x256xf32, #tpu.memory_space<vmem>>, vector<2x256xf32>
    tpu.vector_store %arg11[%c12_91, %c0_92], %130 {strides = array<i32>} : memref<18x256xf32, #tpu.memory_space<vmem>>, vector<2x256xf32>,
    %c0_93 = arith.constant 0 : index
    %c33_94 = arith.constant 33 : index
    %132 = vector.load %arg10[%c0_93, %c33_94] : memref<2x290xf32, #tpu.memory_space<vmem>>, vector<2x256xf32>
    %c14_95 = arith.constant 14 : index
    %c0_96 = arith.constant 0 : index
    %133 = vector.load %arg11[%c14_95, %c0_96] : memref<18x256xf32, #tpu.memory_space<vmem>>, vector<2x256xf32>
    tpu.vector_store %arg11[%c14_95, %c0_96], %132 {strides = array<i32>} : memref<18x256xf32, #tpu.memory_space<vmem>>, vector<2x256xf32>,
    %c0_97 = arith.constant 0 : index
    %c34_98 = arith.constant 34 : index
    %134 = vector.load %arg10[%c0_97, %c34_98] : memref<2x290xf32, #tpu.memory_space<vmem>>, vector<2x256xf32>
    %cst_99 = arith.constant 0.000000e+00 : f32
    %135 = vector.shape_cast %22 : vector<1x256xi1> to vector<1x256xi1>
    %136 = vector.broadcast %135 : vector<1x256xi1> to vector<2x256xi1>
    %137 = vector.broadcast %cst_99 : f32 to vector<2x256xf32>
    %138 = arith.select %136, %134, %137 : vector<2x256xi1>, vector<2x256xf32>
    %c16_100 = arith.constant 16 : index
    %c0_101 = arith.constant 0 : index
    %139 = vector.load %arg11[%c16_100, %c0_101] : memref<18x256xf32, #tpu.memory_space<vmem>>, vector<2x256xf32>
    tpu.vector_store %arg11[%c16_100, %c0_101], %138 {strides = array<i32>} : memref<18x256xf32, #tpu.memory_space<vmem>>, vector<2x256xf32>,
    %c0_102 = arith.constant 0 : index
    %c0_103 = arith.constant 0 : index
    %140 = vector.load %arg6[%c0_102, %c0_103] : memref<2x18xf32, #tpu.memory_space<vmem>>, vector<2x18xf32>
    %c0_104 = arith.constant 0 : index
    %c0_105 = arith.constant 0 : index
    %141 = vector.load %arg11[%c0_104, %c0_105] : memref<18x256xf32, #tpu.memory_space<vmem>>, vector<18x256xf32>
    %cst_106 = arith.constant dense<0.000000e+00> : vector<2x256xf32>
    %142 = tpu.matmul %140, %141, %cst_106 {dimension_numbers = #tpu.dot_dimension_numbers<[1], [0], [0], [1], [0, 0, 1, 1], [], []>} : vector<2x18xf32>, vector<18x256xf32>, vector<2x256xf32> -> vector<2x256xf32>
    %143 = arith.mulf %142, %96 : vector<2x256xf32>
    %c0_107 = arith.constant 0 : index
    %c17_108 = arith.constant 17 : index
    %144 = vector.load %arg10[%c0_107, %c17_108] : memref<2x290xf32, #tpu.memory_space<vmem>>, vector<2x256xf32>
    tpu.vector_store %arg10[%c0_107, %c17_108], %143 {strides = array<i32>} : memref<2x290xf32, #tpu.memory_space<vmem>>, vector<2x256xf32>,
    %c0_109 = arith.constant 0 : index
    %c0_110 = arith.constant 0 : index
    %145 = vector.load %arg10[%c0_109, %c0_110] : memref<2x290xf32, #tpu.memory_space<vmem>>, vector<2x256xf32>
    %cst_111 = arith.constant 0.000000e+00 : f32
    %146 = vector.shape_cast %20 : vector<1x256xi1> to vector<1x256xi1>
    %147 = vector.broadcast %146 : vector<1x256xi1> to vector<2x256xi1>
    %148 = vector.broadcast %cst_111 : f32 to vector<2x256xf32>
    %149 = arith.select %147, %145, %148 : vector<2x256xi1>, vector<2x256xf32>
    %c0_112 = arith.constant 0 : index
    %c0_113 = arith.constant 0 : index
    %150 = vector.load %arg11[%c0_112, %c0_113] : memref<18x256xf32, #tpu.memory_space<vmem>>, vector<2x256xf32>
    tpu.vector_store %arg11[%c0_112, %c0_113], %149 {strides = array<i32>} : memref<18x256xf32, #tpu.memory_space<vmem>>, vector<2x256xf32>,
    %c0_114 = arith.constant 0 : index
    %c1_115 = arith.constant 1 : index
    %151 = vector.load %arg10[%c0_114, %c1_115] : memref<2x290xf32, #tpu.memory_space<vmem>>, vector<2x256xf32>
    %c2_116 = arith.constant 2 : index
    %c0_117 = arith.constant 0 : index
    %152 = vector.load %arg11[%c2_116, %c0_117] : memref<18x256xf32, #tpu.memory_space<vmem>>, vector<2x256xf32>
    tpu.vector_store %arg11[%c2_116, %c0_117], %151 {strides = array<i32>} : memref<18x256xf32, #tpu.memory_space<vmem>>, vector<2x256xf32>,
    %c0_118 = arith.constant 0 : index
    %c2_119 = arith.constant 2 : index
    %153 = vector.load %arg10[%c0_118, %c2_119] : memref<2x290xf32, #tpu.memory_space<vmem>>, vector<2x256xf32>
    %cst_120 = arith.constant 0.000000e+00 : f32
    %154 = vector.shape_cast %22 : vector<1x256xi1> to vector<1x256xi1>
    %155 = vector.broadcast %154 : vector<1x256xi1> to vector<2x256xi1>
    %156 = vector.broadcast %cst_120 : f32 to vector<2x256xf32>
    %157 = arith.select %155, %153, %156 : vector<2x256xi1>, vector<2x256xf32>
    %c4_121 = arith.constant 4 : index
    %c0_122 = arith.constant 0 : index
    %158 = vector.load %arg11[%c4_121, %c0_122] : memref<18x256xf32, #tpu.memory_space<vmem>>, vector<2x256xf32>
    tpu.vector_store %arg11[%c4_121, %c0_122], %157 {strides = array<i32>} : memref<18x256xf32, #tpu.memory_space<vmem>>, vector<2x256xf32>,
    %c0_123 = arith.constant 0 : index
    %c16_124 = arith.constant 16 : index
    %159 = vector.load %arg10[%c0_123, %c16_124] : memref<2x290xf32, #tpu.memory_space<vmem>>, vector<2x256xf32>
    %cst_125 = arith.constant 0.000000e+00 : f32
    %160 = vector.shape_cast %20 : vector<1x256xi1> to vector<1x256xi1>
    %161 = vector.broadcast %160 : vector<1x256xi1> to vector<2x256xi1>
    %162 = vector.broadcast %cst_125 : f32 to vector<2x256xf32>
    %163 = arith.select %161, %159, %162 : vector<2x256xi1>, vector<2x256xf32>
    %c6_126 = arith.constant 6 : index
    %c0_127 = arith.constant 0 : index
    %164 = vector.load %arg11[%c6_126, %c0_127] : memref<18x256xf32, #tpu.memory_space<vmem>>, vector<2x256xf32>
    tpu.vector_store %arg11[%c6_126, %c0_127], %163 {strides = array<i32>} : memref<18x256xf32, #tpu.memory_space<vmem>>, vector<2x256xf32>,
    %c0_128 = arith.constant 0 : index
    %c17_129 = arith.constant 17 : index
    %165 = vector.load %arg10[%c0_128, %c17_129] : memref<2x290xf32, #tpu.memory_space<vmem>>, vector<2x256xf32>
    %c8_130 = arith.constant 8 : index
    %c0_131 = arith.constant 0 : index
    %166 = vector.load %arg11[%c8_130, %c0_131] : memref<18x256xf32, #tpu.memory_space<vmem>>, vector<2x256xf32>
    tpu.vector_store %arg11[%c8_130, %c0_131], %165 {strides = array<i32>} : memref<18x256xf32, #tpu.memory_space<vmem>>, vector<2x256xf32>,
    %c0_132 = arith.constant 0 : index
    %c18_133 = arith.constant 18 : index
    %167 = vector.load %arg10[%c0_132, %c18_133] : memref<2x290xf32, #tpu.memory_space<vmem>>, vector<2x256xf32>
    %cst_134 = arith.constant 0.000000e+00 : f32
    %168 = vector.shape_cast %22 : vector<1x256xi1> to vector<1x256xi1>
    %169 = vector.broadcast %168 : vector<1x256xi1> to vector<2x256xi1>
    %170 = vector.broadcast %cst_134 : f32 to vector<2x256xf32>
    %171 = arith.select %169, %167, %170 : vector<2x256xi1>, vector<2x256xf32>
    %c10_135 = arith.constant 10 : index
    %c0_136 = arith.constant 0 : index
    %172 = vector.load %arg11[%c10_135, %c0_136] : memref<18x256xf32, #tpu.memory_space<vmem>>, vector<2x256xf32>
    tpu.vector_store %arg11[%c10_135, %c0_136], %171 {strides = array<i32>} : memref<18x256xf32, #tpu.memory_space<vmem>>, vector<2x256xf32>,
    %c0_137 = arith.constant 0 : index
    %c32_138 = arith.constant 32 : index
    %173 = vector.load %arg10[%c0_137, %c32_138] : memref<2x290xf32, #tpu.memory_space<vmem>>, vector<2x256xf32>
    %cst_139 = arith.constant 0.000000e+00 : f32
    %174 = vector.shape_cast %20 : vector<1x256xi1> to vector<1x256xi1>
    %175 = vector.broadcast %174 : vector<1x256xi1> to vector<2x256xi1>
    %176 = vector.broadcast %cst_139 : f32 to vector<2x256xf32>
    %177 = arith.select %175, %173, %176 : vector<2x256xi1>, vector<2x256xf32>
    %c12_140 = arith.constant 12 : index
    %c0_141 = arith.constant 0 : index
    %178 = vector.load %arg11[%c12_140, %c0_141] : memref<18x256xf32, #tpu.memory_space<vmem>>, vector<2x256xf32>
    tpu.vector_store %arg11[%c12_140, %c0_141], %177 {strides = array<i32>} : memref<18x256xf32, #tpu.memory_space<vmem>>, vector<2x256xf32>,
    %c0_142 = arith.constant 0 : index
    %c33_143 = arith.constant 33 : index
    %179 = vector.load %arg10[%c0_142, %c33_143] : memref<2x290xf32, #tpu.memory_space<vmem>>, vector<2x256xf32>
    %c14_144 = arith.constant 14 : index
    %c0_145 = arith.constant 0 : index
    %180 = vector.load %arg11[%c14_144, %c0_145] : memref<18x256xf32, #tpu.memory_space<vmem>>, vector<2x256xf32>
    tpu.vector_store %arg11[%c14_144, %c0_145], %179 {strides = array<i32>} : memref<18x256xf32, #tpu.memory_space<vmem>>, vector<2x256xf32>,
    %c0_146 = arith.constant 0 : index
    %c34_147 = arith.constant 34 : index
    %181 = vector.load %arg10[%c0_146, %c34_147] : memref<2x290xf32, #tpu.memory_space<vmem>>, vector<2x256xf32>
    %cst_148 = arith.constant 0.000000e+00 : f32
    %182 = vector.shape_cast %22 : vector<1x256xi1> to vector<1x256xi1>
    %183 = vector.broadcast %182 : vector<1x256xi1> to vector<2x256xi1>
    %184 = vector.broadcast %cst_148 : f32 to vector<2x256xf32>
    %185 = arith.select %183, %181, %184 : vector<2x256xi1>, vector<2x256xf32>
    %c16_149 = arith.constant 16 : index
    %c0_150 = arith.constant 0 : index
    %186 = vector.load %arg11[%c16_149, %c0_150] : memref<18x256xf32, #tpu.memory_space<vmem>>, vector<2x256xf32>
    tpu.vector_store %arg11[%c16_149, %c0_150], %185 {strides = array<i32>} : memref<18x256xf32, #tpu.memory_space<vmem>>, vector<2x256xf32>,
    %c0_151 = arith.constant 0 : index
    %c0_152 = arith.constant 0 : index
    %187 = vector.load %arg7[%c0_151, %c0_152] : memref<2x18xf32, #tpu.memory_space<vmem>>, vector<2x18xf32>
    %c0_153 = arith.constant 0 : index
    %c0_154 = arith.constant 0 : index
    %188 = vector.load %arg11[%c0_153, %c0_154] : memref<18x256xf32, #tpu.memory_space<vmem>>, vector<18x256xf32>
    %cst_155 = arith.constant dense<0.000000e+00> : vector<2x256xf32>
    %189 = tpu.matmul %187, %188, %cst_155 {dimension_numbers = #tpu.dot_dimension_numbers<[1], [0], [0], [1], [0, 0, 1, 1], [], []>} : vector<2x18xf32>, vector<18x256xf32>, vector<2x256xf32> -> vector<2x256xf32>
    %cst_156 = arith.constant 0.000000e+00 : f32
    %190 = vector.broadcast %cst_156 : f32 to vector<2x256xf32>
    %191 = arith.cmpf oge, %189, %190 : vector<2x256xf32>
    %cst_157 = arith.constant 2.000000e-01 : f32
    %192 = vector.broadcast %cst_157 : f32 to vector<2x256xf32>
    %193 = arith.mulf %192, %189 : vector<2x256xf32>
    %194 = arith.select %191, %189, %193 : vector<2x256xi1>, vector<2x256xf32>
    %c0_158 = arith.constant 0 : index
    %c0_159 = arith.constant 0 : index
    %195 = vector.load %arg11[%c0_158, %c0_159] : memref<18x256xf32, #tpu.memory_space<vmem>>, vector<2x256xf32>
    tpu.vector_store %arg11[%c0_158, %c0_159], %84 {strides = array<i32>} : memref<18x256xf32, #tpu.memory_space<vmem>>, vector<2x256xf32>,
    %c2_160 = arith.constant 2 : index
    %c0_161 = arith.constant 0 : index
    %196 = vector.load %arg11[%c2_160, %c0_161] : memref<18x256xf32, #tpu.memory_space<vmem>>, vector<2x256xf32>
    tpu.vector_store %arg11[%c2_160, %c0_161], %194 {strides = array<i32>} : memref<18x256xf32, #tpu.memory_space<vmem>>, vector<2x256xf32>,
    %c0_162 = arith.constant 0 : index
    %c0_163 = arith.constant 0 : index
    %197 = vector.load %arg8[%c0_162, %c0_163] : memref<4x4xf32, #tpu.memory_space<vmem>>, vector<4x4xf32>
    %c0_164 = arith.constant 0 : index
    %c0_165 = arith.constant 0 : index
    %198 = vector.load %arg11[%c0_164, %c0_165] : memref<18x256xf32, #tpu.memory_space<vmem>>, vector<4x256xf32>
    %cst_166 = arith.constant dense<0.000000e+00> : vector<4x256xf32>
    %199 = tpu.matmul %197, %198, %cst_166 {dimension_numbers = #tpu.dot_dimension_numbers<[1], [0], [0], [1], [0, 0, 1, 1], [], []>} : vector<4x4xf32>, vector<4x256xf32>, vector<4x256xf32> -> vector<4x256xf32>
    %200 = arith.addf %199, %1 : vector<4x256xf32>
    %c0_167 = arith.constant 0 : index
    %c0_168 = arith.constant 0 : index
    %c0_169 = arith.constant 0 : index
    %201 = vector.load %arg9[%c0_167, %c0_168, %c0_169] : memref<1x4x256xf32, #tpu.memory_space<vmem>>, vector<1x4x256xf32>
    %202 = vector.shape_cast %201 : vector<1x4x256xf32> to vector<4x256xf32>
    %203 = vector.shape_cast %200 : vector<4x256xf32> to vector<1x4x256xf32>
    tpu.vector_store %arg9[%c0_167, %c0_168, %c0_169], %203 {strides = array<i32>} : memref<1x4x256xf32, #tpu.memory_space<vmem>>, vector<1x4x256xf32>,
    return
  }
  func.func @transform_0(%arg0: i32) -> (i32, i32, i32) {
    %c0_i32 = arith.constant 0 : i32
    %c0_i32_0 = arith.constant 0 : i32
    %c0_i32_1 = arith.constant 0 : i32
    return %arg0, %c0_i32, %c0_i32_0 : i32, i32, i32
  }
  func.func @transform_1(%arg0: i32) -> (i32, i32) {
    %c0_i32 = arith.constant 0 : i32
    %c0_i32_0 = arith.constant 0 : i32
    %c0_i32_1 = arith.constant 0 : i32
    return %c0_i32, %c0_i32_0 : i32, i32
  }
  func.func @transform_2(%arg0: i32) -> (i32, i32) {
    %c0_i32 = arith.constant 0 : i32
    %c0_i32_0 = arith.constant 0 : i32
    %c0_i32_1 = arith.constant 0 : i32
    return %c0_i32, %c0_i32_0 : i32, i32
  }
  func.func @transform_3(%arg0: i32) -> (i32, i32) {
    %c0_i32 = arith.constant 0 : i32
    %c0_i32_0 = arith.constant 0 : i32
    %c0_i32_1 = arith.constant 0 : i32
    return %c0_i32, %c0_i32_0 : i32, i32
  }
  func.func @transform_4(%arg0: i32) -> (i32, i32) {
    %c0_i32 = arith.constant 0 : i32
    %c0_i32_0 = arith.constant 0 : i32
    %c0_i32_1 = arith.constant 0 : i32
    return %c0_i32, %c0_i32_0 : i32, i32
  }
  func.func @transform_5(%arg0: i32) -> (i32, i32) {
    %c0_i32 = arith.constant 0 : i32
    %c0_i32_0 = arith.constant 0 : i32
    %c0_i32_1 = arith.constant 0 : i32
    return %c0_i32, %c0_i32_0 : i32, i32
  }
  func.func @transform_6(%arg0: i32) -> (i32, i32) {
    %c0_i32 = arith.constant 0 : i32
    %c0_i32_0 = arith.constant 0 : i32
    %c0_i32_1 = arith.constant 0 : i32
    return %c0_i32, %c0_i32_0 : i32, i32
  }
  func.func @transform_7(%arg0: i32) -> (i32, i32) {
    %c0_i32 = arith.constant 0 : i32
    %c0_i32_0 = arith.constant 0 : i32
    %c0_i32_1 = arith.constant 0 : i32
    return %c0_i32, %c0_i32_0 : i32, i32
  }
  func.func @transform_8(%arg0: i32) -> (i32, i32, i32) {
    %c0_i32 = arith.constant 0 : i32
    %c0_i32_0 = arith.constant 0 : i32
    %c0_i32_1 = arith.constant 0 : i32
    return %arg0, %c0_i32, %c0_i32_0 : i32, i32, i32
  }
}

</mosaic_0001>

<llo_original>
// kernel: tpu_custom_call.1
$region0: #{tpu_custom_call.1}
  #allocation0 [shape = 'u32[]', space=smem, size = 0x4, offset = 0x4, fixed_abs, tag = 'smem constant byte address 0x4 - core index']
  #allocation1 [shape = 'u32[144,128]{1,0:T(1,128)}', space=vmem, size = 0x12000, scoped, tag = 'internal scratch']
  #allocation2 [shape = 'f32[2,290]{1,0:T(2,128)}', space=vmem, size = 0xc00, scoped, tag = 'scratch operand']
  #allocation3 [shape = 'f32[18,256]{1,0:T(8,128)}', space=vmem, size = 0x6000, scoped, tag = 'scratch operand']
  %s0 = inlined_call_operand.hbm [shape: f32[2,4,256], index: 0, kind: input, shape index: {}]
  %s1 = inlined_call_operand.vmem [shape: f32[4,4], index: 1, kind: input, shape index: {}]
  %s2 = inlined_call_operand.vmem [shape: f32[2,18], index: 2, kind: input, shape index: {}]
  %s3 = inlined_call_operand.vmem [shape: f32[2,2], index: 3, kind: input, shape index: {}]
  %s4 = inlined_call_operand.vmem [shape: f32[2,1], index: 4, kind: input, shape index: {}]
  %s5 = inlined_call_operand.vmem [shape: f32[2,18], index: 5, kind: input, shape index: {}]
  %s6 = inlined_call_operand.vmem [shape: f32[2,18], index: 6, kind: input, shape index: {}]
  %s7 = inlined_call_operand.vmem [shape: f32[4,4], index: 7, kind: input, shape index: {}]
  %s8 = inlined_call_operand.hbm [shape: f32[2,4,256], index: 8, kind: output, shape index: {}]
  %s9 = sld [smem:[#allocation0]]
  $region69: #{tpu_custom_call.1} parent=0
    _
  %s11 = ssub.s32 1, %s9
  %s12 = scalar_select 0, %s11, %s9
  $region1: #{tpu_custom_call.1} parent=0
    #allocation4 [shape = 'u8[8192]{0}', space=vmem, size = 0x2000, scoped, tag = 'input window, operand 0']
    #allocation5 [shape = 's32[2]{0}', space=sflag, size = 0x8, scoped, tag = 'scoped memory for tpu_custom_call.1']
    #allocation6 [shape = 's32[2]{0}', space=sflag, size = 0x8, scoped, tag = 'scoped memory for tpu_custom_call.1']
    #allocation7 [shape = 'u8[8192]{0}', space=vmem, size = 0x2000, scoped, tag = 'output window, operand 0']
    %13 = vsyncpa [#allocation5], 0
    %s14 = scalar_lea.sflag [#allocation5], 1
    %15 = vsyncpa %s14, 0
    %16 = vsyncpa [#allocation6], 0
    %s17 = scalar_lea.sflag [#allocation6], 1
    %18 = vsyncpa %s17, 0
    loop: start=0, step=1, limit=4
    $region2: #{tpu_custom_call.1} parent=1 // loop_pre_header
      _
    $region3: #{tpu_custom_call.1} parent=1 // loop_header
      %s20 = sphi 0, %s24
      %p21 = scmp.ge.s32.totalorder %s20, 4
      %s30 = sphi 0, %s32
      %s33 = sphi 0, %s30
      %s34 = sphi 0, %s33
      %s50 = sphi 0, %s34
      %s54 = sphi 0, %s54
      %s56 = sphi 0, %s54
      %s57 = sphi 0, %s56
      %s71 = sphi 0, %s57
      %s75 = sphi 0, %s75
      %s77 = sphi 0, %s75
      %s78 = sphi 0, %s77
      %s92 = sphi 0, %s78
      %s96 = sphi 0, %s96
      %s98 = sphi 0, %s96
      %s99 = sphi 0, %s98
      %s113 = sphi 0, %s99
      %s117 = sphi 0, %s117
      %s119 = sphi 0, %s117
      %s120 = sphi 0, %s119
      %s134 = sphi 0, %s120
      %s138 = sphi 0, %s138
      %s140 = sphi 0, %s138
      %s141 = sphi 0, %s140
      %s155 = sphi 0, %s141
      %s159 = sphi 0, %s159
      %s161 = sphi 0, %s159
      %s162 = sphi 0, %s161
      %s176 = sphi 0, %s162
      %s180 = sphi 0, %s180
      %s182 = sphi 0, %s180
      %s183 = sphi 0, %s182
      %s197 = sphi 0, %s183
      %s203 = sphi 0, %s205
      %s206 = sphi 0, %s203
      %s207 = sphi 0, %s206
      %s223 = sphi 0, %s207
    $region4: #{tpu_custom_call.1} parent=1 // loop_header_branch
      %23 = sbr.rel (%p21) target = $region8
    $region5: #{tpu_custom_call.1} parent=1 // loop_body
      %s25 = ssub.s32 %s20, 1
      %s26 = ssub.s32 %s20, 2
      %s27 = sadd.s32 %s20, 1
      %s28 = ssub.s32 %s20, %s27
      %p29 = scmp.eq.s32.totalorder %s28, 0
      %s31 = sadd.s32 %s30, 1
      %s32 = scalar_select %p29, %s30, %s31
      %p35 = pneg %p29
      %p36 = scmp.eq.s32.totalorder %s20, 1
      %p37 = por %p35, %p36
      %p38 = scmp.ne.s32.totalorder %s30, %s33
      %p39 = scmp.eq.s32.totalorder %s20, 0
      %p40 = por %p38, %p39
      %p41 = scmp.ne.s32.totalorder %s30, %s33
      %p42 = scmp.eq.s32.totalorder %s25, 1
      %p43 = por %p41, %p42
      %p44 = scmp.ne.s32.totalorder %s33, %s34
      %p45 = scmp.eq.s32.totalorder %s25, 0
      %p46 = por %p44, %p45
      %p47 = scmp.ne.s32.totalorder %s33, %s34
      %p48 = scmp.eq.s32.totalorder %s26, 1
      %p49 = por %p47, %p48
      %p51 = scmp.ne.s32.totalorder %s34, %s50
      %p52 = scmp.eq.s32.totalorder %s26, 0
      %p53 = por %p51, %p52
      %s55 = sadd.s32 %s54, 1
      %p58 = scmp.eq.s32.totalorder %s20, 1
      %p59 = scmp.ne.s32.totalorder %s54, %s56
      %p60 = scmp.eq.s32.totalorder %s20, 0
      %p61 = por %p59, %p60
      %p62 = scmp.ne.s32.totalorder %s54, %s56
      %p63 = scmp.eq.s32.totalorder %s25, 1
      %p64 = por %p62, %p63
      %p65 = scmp.ne.s32.totalorder %s56, %s57
      %p66 = scmp.eq.s32.totalorder %s25, 0
      %p67 = por %p65, %p66
      %p68 = scmp.ne.s32.totalorder %s56, %s57
      %p69 = scmp.eq.s32.totalorder %s26, 1
      %p70 = por %p68, %p69
      %p72 = scmp.ne.s32.totalorder %s57, %s71
      %p73 = scmp.eq.s32.totalorder %s26, 0
      %p74 = por %p72, %p73
      %s76 = sadd.s32 %s75, 1
      %p79 = scmp.eq.s32.totalorder %s20, 1
      %p80 = scmp.ne.s32.totalorder %s75, %s77
      %p81 = scmp.eq.s32.totalorder %s20, 0
      %p82 = por %p80, %p81
      %p83 = scmp.ne.s32.totalorder %s75, %s77
      %p84 = scmp.eq.s32.totalorder %s25, 1
      %p85 = por %p83, %p84
      %p86 = scmp.ne.s32.totalorder %s77, %s78
      %p87 = scmp.eq.s32.totalorder %s25, 0
      %p88 = por %p86, %p87
      %p89 = scmp.ne.s32.totalorder %s77, %s78
      %p90 = scmp.eq.s32.totalorder %s26, 1
      %p91 = por %p89, %p90
      %p93 = scmp.ne.s32.totalorder %s78, %s92
      %p94 = scmp.eq.s32.totalorder %s26, 0
      %p95 = por %p93, %p94
      %s97 = sadd.s32 %s96, 1
      %p100 = scmp.eq.s32.totalorder %s20, 1
      %p101 = scmp.ne.s32.totalorder %s96, %s98
      %p102 = scmp.eq.s32.totalorder %s20, 0
      %p103 = por %p101, %p102
      %p104 = scmp.ne.s32.totalorder %s96, %s98
      %p105 = scmp.eq.s32.totalorder %s25, 1
      %p106 = por %p104, %p105
      %p107 = scmp.ne.s32.totalorder %s98, %s99
      %p108 = scmp.eq.s32.totalorder %s25, 0
      %p109 = por %p107, %p108
      %p110 = scmp.ne.s32.totalorder %s98, %s99
      %p111 = scmp.eq.s32.totalorder %s26, 1
      %p112 = por %p110, %p111
      %p114 = scmp.ne.s32.totalorder %s99, %s113
      %p115 = scmp.eq.s32.totalorder %s26, 0
      %p116 = por %p114, %p115
      %s118 = sadd.s32 %s117, 1
      %p121 = scmp.eq.s32.totalorder %s20, 1
      %p122 = scmp.ne.s32.totalorder %s117, %s119
      %p123 = scmp.eq.s32.totalorder %s20, 0
      %p124 = por %p122, %p123
      %p125 = scmp.ne.s32.totalorder %s117, %s119
      %p126 = scmp.eq.s32.totalorder %s25, 1
      %p127 = por %p125, %p126
      %p128 = scmp.ne.s32.totalorder %s119, %s120
      %p129 = scmp.eq.s32.totalorder %s25, 0
      %p130 = por %p128, %p129
      %p131 = scmp.ne.s32.totalorder %s119, %s120
      %p132 = scmp.eq.s32.totalorder %s26, 1
      %p133 = por %p131, %p132
      %p135 = scmp.ne.s32.totalorder %s120, %s134
      %p136 = scmp.eq.s32.totalorder %s26, 0
      %p137 = por %p135, %p136
      %s139 = sadd.s32 %s138, 1
      %p142 = scmp.eq.s32.totalorder %s20, 1
      %p143 = scmp.ne.s32.totalorder %s138, %s140
      %p144 = scmp.eq.s32.totalorder %s20, 0
      %p145 = por %p143, %p144
      %p146 = scmp.ne.s32.totalorder %s138, %s140
      %p147 = scmp.eq.s32.totalorder %s25, 1
      %p148 = por %p146, %p147
      %p149 = scmp.ne.s32.totalorder %s140, %s141
      %p150 = scmp.eq.s32.totalorder %s25, 0
      %p151 = por %p149, %p150
      %p152 = scmp.ne.s32.totalorder %s140, %s141
      %p153 = scmp.eq.s32.totalorder %s26, 1
      %p154 = por %p152, %p153
      %p156 = scmp.ne.s32.totalorder %s141, %s155
      %p157 = scmp.eq.s32.totalorder %s26, 0
      %p158 = por %p156, %p157
      %s160 = sadd.s32 %s159, 1
      %p163 = scmp.eq.s32.totalorder %s20, 1
      %p164 = scmp.ne.s32.totalorder %s159, %s161
      %p165 = scmp.eq.s32.totalorder %s20, 0
      %p166 = por %p164, %p165
      %p167 = scmp.ne.s32.totalorder %s159, %s161
      %p168 = scmp.eq.s32.totalorder %s25, 1
      %p169 = por %p167, %p168
      %p170 = scmp.ne.s32.totalorder %s161, %s162
      %p171 = scmp.eq.s32.totalorder %s25, 0
      %p172 = por %p170, %p171
      %p173 = scmp.ne.s32.totalorder %s161, %s162
      %p174 = scmp.eq.s32.totalorder %s26, 1
      %p175 = por %p173, %p174
      %p177 = scmp.ne.s32.totalorder %s162, %s176
      %p178 = scmp.eq.s32.totalorder %s26, 0
      %p179 = por %p177, %p178
      %s181 = sadd.s32 %s180, 1
      %p184 = scmp.eq.s32.totalorder %s20, 1
      %p185 = scmp.ne.s32.totalorder %s180, %s182
      %p186 = scmp.eq.s32.totalorder %s20, 0
      %p187 = por %p185, %p186
      %p188 = scmp.ne.s32.totalorder %s180, %s182
      %p189 = scmp.eq.s32.totalorder %s25, 1
      %p190 = por %p188, %p189
      %p191 = scmp.ne.s32.totalorder %s182, %s183
      %p192 = scmp.eq.s32.totalorder %s25, 0
      %p193 = por %p191, %p192
      %p194 = scmp.ne.s32.totalorder %s182, %s183
      %p195 = scmp.eq.s32.totalorder %s26, 1
      %p196 = por %p194, %p195
      %p198 = scmp.ne.s32.totalorder %s183, %s197
      %p199 = scmp.eq.s32.totalorder %s26, 0
      %p200 = por %p198, %p199
      %s201 = ssub.s32 %s20, %s27
      %p202 = scmp.eq.s32.totalorder %s201, 0
      %s204 = sadd.s32 %s203, 1
      %s205 = scalar_select %p202, %s203, %s204
      %p208 = pneg %p202
      %p209 = scmp.eq.s32.totalorder %s20, 1
      %p210 = por %p208, %p209
      %p211 = scmp.ne.s32.totalorder %s203, %s206
      %p212 = scmp.eq.s32.totalorder %s20, 0
      %p213 = por %p211, %p212
      %p214 = scmp.ne.s32.totalorder %s203, %s206
      %p215 = scmp.eq.s32.totalorder %s25, 1
      %p216 = por %p214, %p215
      %p217 = scmp.ne.s32.totalorder %s206, %s207
      %p218 = scmp.eq.s32.totalorder %s25, 0
      %p219 = por %p217, %p218
      %p220 = scmp.ne.s32.totalorder %s206, %s207
      %p221 = scmp.eq.s32.totalorder %s26, 1
      %p222 = por %p220, %p221
      %p224 = scmp.ne.s32.totalorder %s207, %s223
      %p225 = scmp.eq.s32.totalorder %s26, 0
      %p226 = por %p224, %p225
      %p227 = scmp.le.s32.totalorder 1, %s20
      %p228 = scmp.lt.s32.totalorder %s20, 3
      %p229 = pnand %p227, %p228
      %p230 = pneg %p229
      // Predicated region
      $region9: #{tpu_custom_call.1} parent=5 // pred_check
        _
      $region10: #{tpu_custom_call.1} parent=5 // pred_check_branch
        %232 = sbr.rel (%p229) target = $region12
      $region11: #{tpu_custom_call.1} parent=5 // pred_region
        %s233 = ssub.s32 %s20, 1
        // Predicated region
        $region13: #{tpu_custom_call.1} parent=11 // pred_check
          %p234 = pneg %p67
        $region14: #{tpu_custom_call.1} parent=11 // pred_check_branch
          %236 = sbr.rel (%p234) target = $region16
        $region15: #{tpu_custom_call.1} parent=11 // pred_region
          _
        $region16: #{tpu_custom_call.1} parent=11 // pred_fallthru
          _
        // Predicated region
        $region17: #{tpu_custom_call.1} parent=11 // pred_check
          %p237 = pneg %p88
        $region18: #{tpu_custom_call.1} parent=11 // pred_check_branch
          %239 = sbr.rel (%p237) target = $region20
        $region19: #{tpu_custom_call.1} parent=11 // pred_region
          _
        $region20: #{tpu_custom_call.1} parent=11 // pred_fallthru
          _
        // Predicated region
        $region21: #{tpu_custom_call.1} parent=11 // pred_check
          %p240 = pneg %p109
        $region22: #{tpu_custom_call.1} parent=11 // pred_check_branch
          %242 = sbr.rel (%p240) target = $region24
        $region23: #{tpu_custom_call.1} parent=11 // pred_region
          _
        $region24: #{tpu_custom_call.1} parent=11 // pred_fallthru
          _
        // Predicated region
        $region25: #{tpu_custom_call.1} parent=11 // pred_check
          %p243 = pneg %p130
        $region26: #{tpu_custom_call.1} parent=11 // pred_check_branch
          %245 = sbr.rel (%p243) target = $region28
        $region27: #{tpu_custom_call.1} parent=11 // pred_region
          _
        $region28: #{tpu_custom_call.1} parent=11 // pred_fallthru
          _
        // Predicated region
        $region29: #{tpu_custom_call.1} parent=11 // pred_check
          %p246 = pneg %p151
        $region30: #{tpu_custom_call.1} parent=11 // pred_check_branch
          %248 = sbr.rel (%p246) target = $region32
        $region31: #{tpu_custom_call.1} parent=11 // pred_region
          _
        $region32: #{tpu_custom_call.1} parent=11 // pred_fallthru
          _
        // Predicated region
        $region33: #{tpu_custom_call.1} parent=11 // pred_check
          %p249 = pneg %p172
        $region34: #{tpu_custom_call.1} parent=11 // pred_check_branch
          %251 = sbr.rel (%p249) target = $region36
        $region35: #{tpu_custom_call.1} parent=11 // pred_region
          _
        $region36: #{tpu_custom_call.1} parent=11 // pred_fallthru
          _
        // Predicated region
        $region37: #{tpu_custom_call.1} parent=11 // pred_check
          %p252 = pneg %p193
        $region38: #{tpu_custom_call.1} parent=11 // pred_check_branch
          %254 = sbr.rel (%p252) target = $region40
        $region39: #{tpu_custom_call.1} parent=11 // pred_region
          _
        $region40: #{tpu_custom_call.1} parent=11 // pred_fallthru
          _
      $region12: #{tpu_custom_call.1} parent=5 // pred_fallthru
        _
      %p255 = scmp.lt.s32.totalorder %s20, 2
      // Predicated region
      $region41: #{tpu_custom_call.1} parent=5 // pred_check
        %p256 = pneg %p255
      $region42: #{tpu_custom_call.1} parent=5 // pred_check_branch
        %258 = sbr.rel (%p256) target = $region44
      $region43: #{tpu_custom_call.1} parent=5 // pred_region
        // Predicated region
        $region45: #{tpu_custom_call.1} parent=43 // pred_check
          %p259 = pneg %p40
        $region46: #{tpu_custom_call.1} parent=43 // pred_check_branch
          %261 = sbr.rel (%p259) target = $region48
        $region47: #{tpu_custom_call.1} parent=43 // pred_region
          %s262 = sand.u32 %s30, 1
          %s263 = scalar_lea.sflag [#allocation5], %s262
          %s264 = sand.u32 %s30, 1
          %s265 = smul.addr %s264, 8
          %s266 = scalar_lea.vmem [#allocation4], %s265
          %s268 = ssub.s32 128, 128
          %269 = vsyncadd %s263, %s268
          %s270 = smul.addr %s20, 2
          %s271 = smul.addr %s270, 64
          %s272 = scalar_lea.hbm %s0, %s271
          %s274 = sshll.u32 %s266, 4
          %s275 = int_to_ptr.vmem [resolvable:$true] %s274
          %277 = dma.hbm_to_vmem [thread:$0]  %s272, 128, %s275, %s263
        $region48: #{tpu_custom_call.1} parent=43 // pred_fallthru
          _
      $region44: #{tpu_custom_call.1} parent=5 // pred_fallthru
        _
      %p278 = scmp.le.s32.totalorder 1, %s20
      %p279 = scmp.lt.s32.totalorder %s20, 3
      %p280 = pnand %p278, %p279
      %p281 = pneg %p280
      // Predicated region
      $region49: #{tpu_custom_call.1} parent=5 // pred_check
        _
      $region50: #{tpu_custom_call.1} parent=5 // pred_check_branch
        %283 = sbr.rel (%p280) target = $region52
      $region51: #{tpu_custom_call.1} parent=5 // pred_region
        %s284 = ssub.s32 %s20, 1
        %s285 = sand.u32 %s33, 1
        %s286 = scalar_lea.sflag [#allocation5], %s285
        %s287 = sand.u32 %s33, 1
        %s288 = smul.addr %s287, 8
        %s289 = scalar_lea.vmem [#allocation4], %s288
        // Predicated region
        $region53: #{tpu_custom_call.1} parent=51 // pred_check
          %p290 = pneg %p46
        $region54: #{tpu_custom_call.1} parent=51 // pred_check_branch
          %292 = sbr.rel (%p290) target = $region56
        $region55: #{tpu_custom_call.1} parent=51 // pred_region
          %293 = dma.done %s286, 128
        $region56: #{tpu_custom_call.1} parent=51 // pred_fallthru
          _
        %s294 = sand.u32 %s33, 1
        %s295 = scalar_lea.sflag [#allocation5], %s294
        %s296 = sand.u32 %s33, 1
        %s297 = smul.addr %s296, 8
        %s298 = scalar_lea.vmem [#allocation4], %s297
        %p299 = pneg %p46
        %p300 = pneg %p43
        %p301 = pneg %p67
        %p302 = pneg %p64
        %p303 = pneg %p88
        %p304 = pneg %p85
        %p305 = pneg %p109
        %p306 = pneg %p106
        %p307 = pneg %p130
        %p308 = pneg %p127
        %p309 = pneg %p151
        %p310 = pneg %p148
        %p311 = pneg %p172
        %p312 = pneg %p169
        %p313 = pneg %p193
        %p314 = pneg %p190
        %p315 = pneg %p219
        %p316 = pneg %p216
        %s317 = sand.u32 %s206, 1
        %s318 = scalar_lea.sflag [#allocation6], %s317
        %s319 = sand.u32 %s206, 1
        %s320 = smul.addr %s319, 8
        %s321 = scalar_lea.vmem [#allocation7], %s320
        %v322 = vld [vmem:[%s289] sm:$0xff]
        %v323 = vlaneseq
        %v324 = vand.u32 %v323, 127
        %v325 = vadd.s32 %v324, 128
        %vm326 = vcmp.lt.s32.totalorder %v324, 0
        %v327 = vsub.s32 0, %v324
        %v328 = vsel %vm326, %v327, %v324
        %v329 = vshrl.u32 %v328, 4
        %v330 = vand.u32 %v328, 15
        %v331 = vsub.s32 0, %v330
        %v332 = vsel %vm326, %v331, %v330
        %vm333 = vcmp.lt.s32.totalorder %v325, 0
        %v334 = vsub.s32 0, %v325
        %v335 = vsel %vm333, %v334, %v325
        %v336 = vshrl.u32 %v335, 4
        %v337 = vand.u32 %v335, 15
        %v338 = vsub.s32 0, %v337
        %v339 = vsel %vm333, %v338, %v337
        %vm340 = vcmp.ne.s32.totalorder %v332, 0
        %vm341 = vcmp.ne.s32.totalorder %v339, 0
        %vm342 = vcmp.lt.s32.totalorder %v332, 0
        %vm343 = vcmp.lt.s32.totalorder %v339, 0
        %vm344 = vmand %vm342, %vm340
        %vm345 = vmand %vm343, %vm341
        %v346 = vadd.s32 %v332, 16
        %v347 = vadd.s32 %v339, 16
        %v348 = vsel %vm344, %v346, %v332
        %v349 = vsel %vm345, %v347, %v339
        %vm350 = vcmp.ne.s32.totalorder %v348, 0
        %vm351 = vcmp.ne.s32.totalorder %v349, 0
        %vm352 = vcmp.ne.s32.totalorder %v348, 15
        %vm353 = vcmp.ne.s32.totalorder %v349, 15
        %vm354 = vcmask 1041408
        %vm355 = vcmask 1043458
        %vm356 = vmor %vm355, %vm354
        %vm357 = vcmask 275460
        %vm358 = vmor %vm357, %vm356
        %359 = vst.msk [vmem:[#allocation2] sm:$0x3f] %vm358, 0.0
        %v360 = vld [vmem:[%s1] sm:$0xf]
        %v362 = vcombine.high %v322, %v322
        %vm363 = vcmask 31744
        %v365 = vsel %vm363, %v360, 0
        %vm367 = vcmask 1043456
        %v368 = vsel %vm367, %v322, 0
        %v370 = vsel %vm367, %v362, 0
        %372 = vmatprep.subr.mxu0 %v370
        %373 = vmatpush1.msra.mxu0 %v368
        %374 = vmatprep.subr.mxu0 0.0
        %375 = vmatpush1.msra.mxu0 0.0
        %376 = vmatprep.subr.mxu0 0.0
        %377 = vmatpush1.msra.mxu0 0.0
        %378 = vmatprep.subr.mxu0 0.0
        %379 = vmatpush1.msra.mxu0 0.0
        %380 = vmatprep.subr.mxu0 0.0
        %381 = vmatpush1.msra.mxu0 0.0
        %382 = vmatprep.subr.mxu0 0.0
        %383 = vmatpush1.msra.mxu0 0.0
        %384 = vmatprep.subr.mxu0 0.0
        %385 = vmatpush1.msra.mxu0 0.0
        %386 = vmatprep.subr.mxu0 0.0
        %387 = vmatpush1.msra.mxu0 0.0
        %388 = vmatprep.subr.mxu0 0.0
        %389 = vmatpush1.msra.mxu0 0.0
        %390 = vmatprep.subr.mxu0 0.0
        %391 = vmatpush1.msra.mxu0 0.0
        %392 = vmatprep.subr.mxu0 0.0
        %393 = vmatpush1.msra.mxu0 0.0
        %394 = vmatprep.subr.mxu0 0.0
        %395 = vmatpush1.msra.mxu0 0.0
        %396 = vmatprep.subr.mxu0 0.0
        %397 = vmatpush1.msra.mxu0 0.0
        %398 = vmatprep.subr.mxu0 0.0
        %399 = vmatpush1.msra.mxu0 0.0
        %400 = vmatprep.subr.mxu0 0.0
        %401 = vmatpush1.msra.mxu0 0.0
        %402 = vmatprep.subr.mxu0 0.0
        %403 = vmatpush1.msra.mxu0 0.0
        %404 = vmatprep.subr.mxu0 0.0
        %405 = vmatpush1.msra.mxu0 0.0
        %406 = vmatprep.subr.mxu0 0.0
        %407 = vmatpush1.msra.mxu0 0.0
        %408 = vmatprep.subr.mxu0 0.0
        %409 = vmatpush1.msra.mxu0 0.0
        %410 = vmatprep.subr.mxu0 0.0
        %411 = vmatpush1.msra.mxu0 0.0
        %412 = vmatprep.subr.mxu0 0.0
        %413 = vmatpush1.msra.mxu0 0.0
        %414 = vmatprep.subr.mxu0 0.0
        %415 = vmatpush1.msra.mxu0 0.0
        %416 = vmatprep.subr.mxu0 0.0
        %417 = vmatpush1.msra.mxu0 0.0
        %418 = vmatprep.subr.mxu0 0.0
        %419 = vmatpush1.msra.mxu0 0.0
        %420 = vmatprep.subr.mxu0 0.0
        %421 = vmatpush1.msra.mxu0 0.0
        %422 = vmatprep.subr.mxu0 0.0
        %423 = vmatpush1.msra.mxu0 0.0
        %424 = vmatprep.subr.mxu0 0.0
        %425 = vmatpush1.msra.mxu0 0.0
        %426 = vmatprep.subr.mxu0 0.0
        %427 = vmatpush1.msra.mxu0 0.0
        %428 = vmatprep.subr.mxu0 0.0
        %429 = vmatpush1.msra.mxu0 0.0
        %430 = vmatprep.subr.mxu0 0.0
        %431 = vmatpush1.msra.mxu0 0.0
        %432 = vmatprep.subr.mxu0 0.0
        %433 = vmatpush1.msra.mxu0 0.0
        %434 = vmatprep.subr.mxu0 0.0
        %435 = vmatpush1.msra.mxu0 0.0
        %436 = vmatprep.mubr.f32.mxu0 0.0
        %437 = vmatmul.mubr.f32.gmra.mrb[0].mxu0 %v365
        %v438 = vpop.f32.mrb[0].mxu0
        %v439 = vadd.f32 0.0, %v438
        %v440 = vpop.f32.mrb[0].mxu0
        %v441 = vadd.f32 0.0, %v440
        %442 = vdwg.mxu0
        %vm443 = vcmp.ge.f32.partialorder %v439, 0.0
        %vm444 = vcmp.ge.f32.partialorder %v441, 0.0
        %v445 = vmul.f32 %v439, 0.2
        %v446 = vmul.f32 %v441, 0.2
        %v447 = vsel %vm443, %v439, %v445
        %v448 = vsel %vm444, %v441, %v446
        %v451 = vcombine.low %v447, %v448
        %v453 = vunpack.c.l.s4 1983009808
        %v454 = vunpack.c.0.s8 %v453
        %v455 = vlaneseq
        %v456 = vshrl.u32 %v455, 7
        %v457 = vsub.s32 %v454, %v456
        %v458 = vrot.slane %v451, %v457
        %459 = vrot.lane.b32.xlu0 %v458, 17
        %v460 = vpop.permute.xlu0 %459
        %v461 = vrot.slane %v460, 6
        %vm462 = vcmask 138240
        %v463 = vsel %vm462, %v461, %v460
        %vm465 = vcmask 1041544
        %vm466 = vmor %vm355, %vm465
        %vm467 = vcmask 136196
        %vm468 = vmor %vm467, %vm466
        %469 = vst.msk [vmem:[#allocation2] sm:$0x3f] %vm468, %v463
        %v470 = vld [vmem:[#allocation2] sm:$0xf]
        %v471 = vsel %vm350, 1, 0
        %v472 = vsel %vm351, 1, 0
        %vm473 = vcmp.eq.s32.totalorder %v471, 1
        %vm474 = vcmp.eq.s32.totalorder %v472, 1
        %v477 = vunpack.c.l.s4 1983009808
        %v478 = vunpack.c.0.s8 %v477
        %v479 = vlaneseq
        %v480 = vshrl.u32 %v479, 7
        %v481 = vsub.s32 %v478, %v480
        %v482 = vrot.slane %v470, %v481
        %v483 = vcombine.high %v482, %v482
        %v486 = vsel %vm473, %v482, 0.0
        %v487 = vsel %vm474, %v483, 0.0
        %488 = vst [vmem:[#allocation3] sm:$0x3] %v486
        %489 = vst [vmem:[#allocation3 + $0x8] sm:$0x3] %v487
        %v490 = vld [vmem:[#allocation2] sm:$0x3f]
        %v492 = vcombine.low %v490, %v490
        %v494 = vunpack.c.l.s4 1983009808
        %v495 = vunpack.c.0.s8 %v494
        %v496 = vlaneseq
        %v497 = vshrl.u32 %v496, 7
        %v498 = vsub.s32 %v495, %v497
        %v499 = vrot.slane %v492, %v498
        %v501 = vunpack.c.l.s4 1983009808
        %v502 = vunpack.c.0.s8 %v501
        %v503 = vlaneseq
        %v504 = vshrl.u32 %v503, 7
        %v505 = vsub.s32 %v502, %v504
        %v506 = vrot.slane %v490, %v505
        %v507 = vcombine.high %v499, %v499
        %508 = vrot.lane.b32.xlu0 %v499, 127
        %v509 = vpop.permute.xlu0 %508
        %510 = vrot.lane.b32.xlu0 %v507, 127
        %v511 = vpop.permute.xlu0 %510
        %512 = vrot.lane.b32.xlu0 %v506, 127
        %v513 = vpop.permute.xlu0 %512
        %vm514 = vcmask 1039360
        %v515 = vsel %vm514, %v509, %v511
        %v516 = vsel %vm514, %v511, %v513
        %519 = vst [vmem:[#allocation3] sm:$0xc] %v515
        %520 = vst [vmem:[#allocation3 + $0x8] sm:$0xc] %v516
        %v521 = vld [vmem:[#allocation2] sm:$0x3f]
        %v522 = vsel %vm352, 1, 0
        %v523 = vsel %vm353, 1, 0
        %vm524 = vcmp.eq.s32.totalorder %v522, 1
        %vm525 = vcmp.eq.s32.totalorder %v523, 1
        %v527 = vcombine.high %v521, %v521
        %v529 = vunpack.c.l.s4 1983009808
        %v530 = vunpack.c.0.s8 %v529
        %v531 = vlaneseq
        %v532 = vshrl.u32 %v531, 7
        %v533 = vsub.s32 %v530, %v532
        %v534 = vrot.slane %v521, %v533
        %v536 = vunpack.c.l.s4 1983009808
        %v537 = vunpack.c.0.s8 %v536
        %v538 = vlaneseq
        %v539 = vshrl.u32 %v538, 7
        %v540 = vsub.s32 %v537, %v539
        %v541 = vrot.slane %v527, %v540
        %v542 = vcombine.high %v534, %v534
        %543 = vrot.lane.b32.xlu0 %v534, 126
        %v544 = vpop.permute.xlu0 %543
        %545 = vrot.lane.b32.xlu0 %v542, 126
        %v546 = vpop.permute.xlu0 %545
        %547 = vrot.lane.b32.xlu0 %v541, 126
        %v548 = vpop.permute.xlu0 %547
        %vm549 = vcmask 1031168
        %v550 = vsel %vm549, %v544, %v546
        %v551 = vsel %vm549, %v546, %v548
        %v554 = vsel %vm524, %v550, 0.0
        %v555 = vsel %vm525, %v551, 0.0
        %v558 = vrot.slane %v554, 4
        %v559 = vrot.slane %v555, 4
        %562 = vst [vmem:[#allocation3] sm:$0x30] %v558
        %563 = vst [vmem:[#allocation3 + $0x8] sm:$0x30] %v559
        %v564 = vld [vmem:[#allocation2] sm:$0x3f]
        %v566 = vcombine.high %v564, %v564
        %v568 = vunpack.c.l.s4 1983009808
        %v569 = vunpack.c.0.s8 %v568
        %v570 = vlaneseq
        %v571 = vshrl.u32 %v570, 7
        %v572 = vsub.s32 %v569, %v571
        %v573 = vrot.slane %v564, %v572
        %v575 = vunpack.c.l.s4 1983009808
        %v576 = vunpack.c.0.s8 %v575
        %v577 = vlaneseq
        %v578 = vshrl.u32 %v577, 7
        %v579 = vsub.s32 %v576, %v578
        %v580 = vrot.slane %v566, %v579
        %v581 = vcombine.high %v573, %v573
        %582 = vrot.lane.b32.xlu0 %v573, 112
        %v583 = vpop.permute.xlu0 %582
        %584 = vrot.lane.b32.xlu0 %v581, 112
        %v585 = vpop.permute.xlu0 %584
        %586 = vrot.lane.b32.xlu0 %v580, 112
        %v587 = vpop.permute.xlu0 %586
        %vm588 = vcmask 916480
        %v589 = vsel %vm588, %v583, %v585
        %v590 = vsel %vm588, %v585, %v587
        %v593 = vsel %vm473, %v589, 0.0
        %v594 = vsel %vm474, %v590, 0.0
        %v597 = vrot.slane %v593, 2
        %v598 = vrot.slane %v594, 2
        %601 = vst [vmem:[#allocation3] sm:$0xc0] %v597
        %602 = vst [vmem:[#allocation3 + $0x8] sm:$0xc0] %v598
        %v603 = vld [vmem:[#allocation2] sm:$0x3f]
        %v605 = vcombine.high %v603, %v603
        %v607 = vunpack.c.l.s4 1983009808
        %v608 = vunpack.c.0.s8 %v607
        %v609 = vlaneseq
        %v610 = vshrl.u32 %v609, 7
        %v611 = vsub.s32 %v608, %v610
        %v612 = vrot.slane %v603, %v611
        %v614 = vunpack.c.l.s4 1983009808
        %v615 = vunpack.c.0.s8 %v614
        %v616 = vlaneseq
        %v617 = vshrl.u32 %v616, 7
        %v618 = vsub.s32 %v615, %v617
        %v619 = vrot.slane %v605, %v618
        %v620 = vcombine.high %v612, %v612
        %621 = vrot.lane.b32.xlu0 %v612, 111
        %v622 = vpop.permute.xlu0 %621
        %623 = vrot.lane.b32.xlu0 %v620, 111
        %v624 = vpop.permute.xlu0 %623
        %625 = vrot.lane.b32.xlu0 %v619, 111
        %v626 = vpop.permute.xlu0 %625
        %vm627 = vcmask 908288
        %v628 = vsel %vm627, %v622, %v624
        %v629 = vsel %vm627, %v624, %v626
        %632 = vst [vmem:[#allocation3 + $0x10] sm:$0x3] %v628
        %633 = vst [vmem:[#allocation3 + $0x18] sm:$0x3] %v629
        %v634 = vld [vmem:[#allocation2] sm:$0x3f]
        %v636 = vcombine.high %v634, %v634
        %v638 = vunpack.c.l.s4 1983009808
        %v639 = vunpack.c.0.s8 %v638
        %v640 = vlaneseq
        %v641 = vshrl.u32 %v640, 7
        %v642 = vsub.s32 %v639, %v641
        %v643 = vrot.slane %v634, %v642
        %v645 = vunpack.c.l.s4 1983009808
        %v646 = vunpack.c.0.s8 %v645
        %v647 = vlaneseq
        %v648 = vshrl.u32 %v647, 7
        %v649 = vsub.s32 %v646, %v648
        %v650 = vrot.slane %v636, %v649
        %v651 = vcombine.high %v643, %v643
        %652 = vrot.lane.b32.xlu0 %v643, 110
        %v653 = vpop.permute.xlu0 %652
        %654 = vrot.lane.b32.xlu0 %v651, 110
        %v655 = vpop.permute.xlu0 %654
        %656 = vrot.lane.b32.xlu0 %v650, 110
        %v657 = vpop.permute.xlu0 %656
        %vm658 = vcmask 900096
        %v659 = vsel %vm658, %v653, %v655
        %v660 = vsel %vm658, %v655, %v657
        %v663 = vsel %vm524, %v659, 0.0
        %v664 = vsel %vm525, %v660, 0.0
        %v667 = vrot.slane %v663, 6
        %v668 = vrot.slane %v664, 6
        %671 = vst [vmem:[#allocation3 + $0x10] sm:$0xc] %v667
        %672 = vst [vmem:[#allocation3 + $0x18] sm:$0xc] %v668
        %v673 = vld [vmem:[#allocation2] sm:$0x3f]
        %v675 = vcombine.high %v673, %v673
        %v677 = vunpack.c.l.s4 1983009808
        %v678 = vunpack.c.0.s8 %v677
        %v679 = vlaneseq
        %v680 = vshrl.u32 %v679, 7
        %v681 = vsub.s32 %v678, %v680
        %v682 = vrot.slane %v673, %v681
        %v684 = vunpack.c.l.s4 1983009808
        %v685 = vunpack.c.0.s8 %v684
        %v686 = vlaneseq
        %v687 = vshrl.u32 %v686, 7
        %v688 = vsub.s32 %v685, %v687
        %v689 = vrot.slane %v675, %v688
        %v690 = vcombine.high %v682, %v682
        %691 = vrot.lane.b32.xlu0 %v682, 96
        %v692 = vpop.permute.xlu0 %691
        %693 = vrot.lane.b32.xlu0 %v690, 96
        %v694 = vpop.permute.xlu0 %693
        %695 = vrot.lane.b32.xlu0 %v689, 96
        %v696 = vpop.permute.xlu0 %695
        %vm697 = vcmask 785408
        %v698 = vsel %vm697, %v692, %v694
        %v699 = vsel %vm697, %v694, %v696
        %v702 = vsel %vm473, %v698, 0.0
        %v703 = vsel %vm474, %v699, 0.0
        %v706 = vrot.slane %v702, 4
        %v707 = vrot.slane %v703, 4
        %710 = vst [vmem:[#allocation3 + $0x10] sm:$0x30] %v706
        %711 = vst [vmem:[#allocation3 + $0x18] sm:$0x30] %v707
        %v712 = vld [vmem:[#allocation2] sm:$0x3f]
        %v714 = vcombine.low %v712, %v712
        %v716 = vunpack.c.l.s4 1983009808
        %v717 = vunpack.c.0.s8 %v716
        %v718 = vlaneseq
        %v719 = vshrl.u32 %v718, 7
        %v720 = vsub.s32 %v717, %v719
        %v721 = vrot.slane %v714, %v720
        %v723 = vunpack.c.l.s4 1983009808
        %v724 = vunpack.c.0.s8 %v723
        %v725 = vlaneseq
        %v726 = vshrl.u32 %v725, 7
        %v727 = vsub.s32 %v724, %v726
        %v728 = vrot.slane %v712, %v727
        %v729 = vcombine.low %v721, %v721
        %v730 = vcombine.low %v728, %v728
        %731 = vrot.lane.b32.xlu0 %v729, 95
        %v732 = vpop.permute.xlu0 %731
        %733 = vrot.lane.b32.xlu0 %v721, 95
        %v734 = vpop.permute.xlu0 %733
        %735 = vrot.lane.b32.xlu0 %v730, 95
        %v736 = vpop.permute.xlu0 %735
        %vm737 = vcmask 777216
        %v738 = vsel %vm737, %v732, %v734
        %v739 = vsel %vm737, %v734, %v736
        %742 = vst [vmem:[#allocation3 + $0x10] sm:$0xc0] %v738
        %743 = vst [vmem:[#allocation3 + $0x18] sm:$0xc0] %v739
        %v744 = vld [vmem:[#allocation2] sm:$0x3f]
        %v746 = vcombine.high %v744, %v744
        %v748 = vunpack.c.l.s4 1983009808
        %v749 = vunpack.c.0.s8 %v748
        %v750 = vlaneseq
        %v751 = vshrl.u32 %v750, 7
        %v752 = vsub.s32 %v749, %v751
        %v753 = vrot.slane %v744, %v752
        %v755 = vunpack.c.l.s4 1983009808
        %v756 = vunpack.c.0.s8 %v755
        %v757 = vlaneseq
        %v758 = vshrl.u32 %v757, 7
        %v759 = vsub.s32 %v756, %v758
        %v760 = vrot.slane %v746, %v759
        %v761 = vcombine.high %v753, %v753
        %762 = vrot.lane.b32.xlu0 %v753, 94
        %v763 = vpop.permute.xlu0 %762
        %764 = vrot.lane.b32.xlu0 %v761, 94
        %v765 = vpop.permute.xlu0 %764
        %766 = vrot.lane.b32.xlu0 %v760, 94
        %v767 = vpop.permute.xlu0 %766
        %vm768 = vcmask 769024
        %v769 = vsel %vm768, %v763, %v765
        %v770 = vsel %vm768, %v765, %v767
        %v773 = vsel %vm524, %v769, 0.0
        %v774 = vsel %vm525, %v770, 0.0
        %775 = vst [vmem:[#allocation3 + $0x20] sm:$0x3] %v773
        %776 = vst [vmem:[#allocation3 + $0x28] sm:$0x3] %v774
        %v777 = vld [vmem:[%s2] sm:$0x3]
        %v778 = vld [vmem:[#allocation3] sm:$0xff]
        %v779 = vld [vmem:[#allocation3 + $0x8] sm:$0xff]
        %v780 = vld [vmem:[#allocation3 + $0x10] sm:$0xff]
        %v781 = vld [vmem:[#allocation3 + $0x18] sm:$0xff]
        %v782 = vld [vmem:[#allocation3 + $0x20] sm:$0x3]
        %v783 = vld [vmem:[#allocation3 + $0x28] sm:$0x3]
        %vm784 = vcmask 146432
        %v786 = vsel %vm784, %v777, 0
        %v789 = vsel %vm354, %v782, 0
        %v792 = vsel %vm354, %v783, 0
        %794 = vmatprep.subr.mxu0 %v779
        %795 = vmatpush1.msra.mxu0 %v778
        %796 = vmatprep.subr.mxu0 %v781
        %797 = vmatpush1.msra.mxu0 %v780
        %798 = vmatprep.subr.mxu0 %v792
        %799 = vmatpush1.msra.mxu0 %v789
        %800 = vmatprep.subr.mxu0 0.0
        %801 = vmatpush1.msra.mxu0 0.0
        %802 = vmatprep.subr.mxu0 0.0
        %803 = vmatpush1.msra.mxu0 0.0
        %804 = vmatprep.subr.mxu0 0.0
        %805 = vmatpush1.msra.mxu0 0.0
        %806 = vmatprep.subr.mxu0 0.0
        %807 = vmatpush1.msra.mxu0 0.0
        %808 = vmatprep.subr.mxu0 0.0
        %809 = vmatpush1.msra.mxu0 0.0
        %810 = vmatprep.subr.mxu0 0.0
        %811 = vmatpush1.msra.mxu0 0.0
        %812 = vmatprep.subr.mxu0 0.0
        %813 = vmatpush1.msra.mxu0 0.0
        %814 = vmatprep.subr.mxu0 0.0
        %815 = vmatpush1.msra.mxu0 0.0
        %816 = vmatprep.subr.mxu0 0.0
        %817 = vmatpush1.msra.mxu0 0.0
        %818 = vmatprep.subr.mxu0 0.0
        %819 = vmatpush1.msra.mxu0 0.0
        %820 = vmatprep.subr.mxu0 0.0
        %821 = vmatpush1.msra.mxu0 0.0
        %822 = vmatprep.subr.mxu0 0.0
        %823 = vmatpush1.msra.mxu0 0.0
        %824 = vmatprep.subr.mxu0 0.0
        %825 = vmatpush1.msra.mxu0 0.0
        %826 = vmatprep.subr.mxu0 0.0
        %827 = vmatpush1.msra.mxu0 0.0
        %828 = vmatprep.subr.mxu0 0.0
        %829 = vmatpush1.msra.mxu0 0.0
        %830 = vmatprep.subr.mxu0 0.0
        %831 = vmatpush1.msra.mxu0 0.0
        %832 = vmatprep.subr.mxu0 0.0
        %833 = vmatpush1.msra.mxu0 0.0
        %834 = vmatprep.subr.mxu0 0.0
        %835 = vmatpush1.msra.mxu0 0.0
        %836 = vmatprep.subr.mxu0 0.0
        %837 = vmatpush1.msra.mxu0 0.0
        %838 = vmatprep.subr.mxu0 0.0
        %839 = vmatpush1.msra.mxu0 0.0
        %840 = vmatprep.subr.mxu0 0.0
        %841 = vmatpush1.msra.mxu0 0.0
        %842 = vmatprep.subr.mxu0 0.0
        %843 = vmatpush1.msra.mxu0 0.0
        %844 = vmatprep.subr.mxu0 0.0
        %845 = vmatpush1.msra.mxu0 0.0
        %846 = vmatprep.subr.mxu0 0.0
        %847 = vmatpush1.msra.mxu0 0.0
        %848 = vmatprep.subr.mxu0 0.0
        %849 = vmatpush1.msra.mxu0 0.0
        %850 = vmatprep.subr.mxu0 0.0
        %851 = vmatpush1.msra.mxu0 0.0
        %852 = vmatprep.subr.mxu0 0.0
        %853 = vmatpush1.msra.mxu0 0.0
        %854 = vmatprep.subr.mxu0 0.0
        %855 = vmatpush1.msra.mxu0 0.0
        %856 = vmatprep.subr.mxu0 0.0
        %857 = vmatpush1.msra.mxu0 0.0
        %858 = vmatprep.mubr.f32.mxu0 0.0
        %859 = vmatmul.mubr.f32.gmra.mrb[0].mxu0 %v786
        %v860 = vpop.f32.mrb[0].mxu0
        %v861 = vadd.f32 0.0, %v860
        %v862 = vpop.f32.mrb[0].mxu0
        %v863 = vadd.f32 0.0, %v862
        %864 = vdwg.mxu0
        %vm865 = vcmp.ge.f32.partialorder %v861, 0.0
        %vm866 = vcmp.ge.f32.partialorder %v863, 0.0
        %v867 = vmul.f32 %v861, 0.2
        %v868 = vmul.f32 %v863, 0.2
        %v869 = vsel %vm865, %v861, %v867
        %v870 = vsel %vm866, %v863, %v868
        %v871 = vld [vmem:[%s3] sm:$0x3]
        %v872 = vld [vmem:[%s4] sm:$0x3]
        %874 = vset.pattern.permute.xlu0 0
        %875 = vperm.xlu0 %874, %v872
        %v876 = vpop.permute.xlu0 %875
        %v878 = vrot.slane %v447, 2
        %v879 = vrot.slane %v448, 2
        %vm880 = vcmask 15360
        %v882 = vsel %vm880, %v871, 0
        %v884 = vsel %vm354, %v878, 0
        %v886 = vsel %vm354, %v879, 0
        %888 = vmatprep.subr.mxu0 %v886
        %889 = vmatpush1.msra.mxu0 %v884
        %890 = vmatprep.subr.mxu0 0.0
        %891 = vmatpush1.msra.mxu0 0.0
        %892 = vmatprep.subr.mxu0 0.0
        %893 = vmatpush1.msra.mxu0 0.0
        %894 = vmatprep.subr.mxu0 0.0
        %895 = vmatpush1.msra.mxu0 0.0
        %896 = vmatprep.subr.mxu0 0.0
        %897 = vmatpush1.msra.mxu0 0.0
        %898 = vmatprep.subr.mxu0 0.0
        %899 = vmatpush1.msra.mxu0 0.0
        %900 = vmatprep.subr.mxu0 0.0
        %901 = vmatpush1.msra.mxu0 0.0
        %902 = vmatprep.subr.mxu0 0.0
        %903 = vmatpush1.msra.mxu0 0.0
        %904 = vmatprep.subr.mxu0 0.0
        %905 = vmatpush1.msra.mxu0 0.0
        %906 = vmatprep.subr.mxu0 0.0
        %907 = vmatpush1.msra.mxu0 0.0
        %908 = vmatprep.subr.mxu0 0.0
        %909 = vmatpush1.msra.mxu0 0.0
        %910 = vmatprep.subr.mxu0 0.0
        %911 = vmatpush1.msra.mxu0 0.0
        %912 = vmatprep.subr.mxu0 0.0
        %913 = vmatpush1.msra.mxu0 0.0
        %914 = vmatprep.subr.mxu0 0.0
        %915 = vmatpush1.msra.mxu0 0.0
        %916 = vmatprep.subr.mxu0 0.0
        %917 = vmatpush1.msra.mxu0 0.0
        %918 = vmatprep.subr.mxu0 0.0
        %919 = vmatpush1.msra.mxu0 0.0
        %920 = vmatprep.subr.mxu0 0.0
        %921 = vmatpush1.msra.mxu0 0.0
        %922 = vmatprep.subr.mxu0 0.0
        %923 = vmatpush1.msra.mxu0 0.0
        %924 = vmatprep.subr.mxu0 0.0
        %925 = vmatpush1.msra.mxu0 0.0
        %926 = vmatprep.subr.mxu0 0.0
        %927 = vmatpush1.msra.mxu0 0.0
        %928 = vmatprep.subr.mxu0 0.0
        %929 = vmatpush1.msra.mxu0 0.0
        %930 = vmatprep.subr.mxu0 0.0
        %931 = vmatpush1.msra.mxu0 0.0
        %932 = vmatprep.subr.mxu0 0.0
        %933 = vmatpush1.msra.mxu0 0.0
        %934 = vmatprep.subr.mxu0 0.0
        %935 = vmatpush1.msra.mxu0 0.0
        %936 = vmatprep.subr.mxu0 0.0
        %937 = vmatpush1.msra.mxu0 0.0
        %938 = vmatprep.subr.mxu0 0.0
        %939 = vmatpush1.msra.mxu0 0.0
        %940 = vmatprep.subr.mxu0 0.0
        %941 = vmatpush1.msra.mxu0 0.0
        %942 = vmatprep.subr.mxu0 0.0
        %943 = vmatpush1.msra.mxu0 0.0
        %944 = vmatprep.subr.mxu0 0.0
        %945 = vmatpush1.msra.mxu0 0.0
        %946 = vmatprep.subr.mxu0 0.0
        %947 = vmatpush1.msra.mxu0 0.0
        %948 = vmatprep.subr.mxu0 0.0
        %949 = vmatpush1.msra.mxu0 0.0
        %950 = vmatprep.subr.mxu0 0.0
        %951 = vmatpush1.msra.mxu0 0.0
        %952 = vmatprep.mubr.f32.mxu0 0.0
        %953 = vmatmul.mubr.f32.gmra.mrb[0].mxu0 %v882
        %v954 = vpop.f32.mrb[0].mxu0
        %v955 = vadd.f32 %v876, %v954
        %v956 = vpop.f32.mrb[0].mxu0
        %v957 = vadd.f32 %v876, %v956
        %958 = vdwg.mxu0
        %v959 = vsub.f32 0.0, %v955
        %v960 = vsub.f32 0.0, %v957
        %v961 = vmul.f32 %v959, 1.442695
        %v962 = vpow.pop %v961
        %v963 = vmul.f32 %v960, 1.442695
        %v964 = vpow.pop %v963
        %v965 = vadd.f32 %v962, 1.0
        %v966 = vadd.f32 %v964, 1.0
        %v967 = vrcp.pop %v965
        %v968 = vmul.f32 1.0, %v967
        %v969 = vrcp.pop %v966
        %v970 = vmul.f32 1.0, %v969
        %v971 = vcombine.high %v458, %v458
        %972 = vrot.lane.b32.xlu0 %v971, 17
        %v973 = vpop.permute.xlu0 %972
        %v974 = vrot.slane %v973, 6
        %v975 = vsel %vm462, %v974, %v973
        %977 = vst.msk [vmem:[#allocation2] sm:$0x3f] %vm468, %v975
        %v978 = vld [vmem:[#allocation2] sm:$0xf]
        %v981 = vunpack.c.l.s4 1983009808
        %v982 = vunpack.c.0.s8 %v981
        %v983 = vlaneseq
        %v984 = vshrl.u32 %v983, 7
        %v985 = vsub.s32 %v982, %v984
        %v986 = vrot.slane %v978, %v985
        %v987 = vcombine.high %v986, %v986
        %v990 = vsel %vm473, %v986, 0.0
        %v991 = vsel %vm474, %v987, 0.0
        %992 = vst [vmem:[#allocation3] sm:$0x3] %v990
        %993 = vst [vmem:[#allocation3 + $0x8] sm:$0x3] %v991
        %v994 = vld [vmem:[#allocation2] sm:$0x3f]
        %v996 = vcombine.low %v994, %v994
        %v998 = vunpack.c.l.s4 1983009808
        %v999 = vunpack.c.0.s8 %v998
        %v1000 = vlaneseq
        %v1001 = vshrl.u32 %v1000, 7
        %v1002 = vsub.s32 %v999, %v1001
        %v1003 = vrot.slane %v996, %v1002
        %v1005 = vunpack.c.l.s4 1983009808
        %v1006 = vunpack.c.0.s8 %v1005
        %v1007 = vlaneseq
        %v1008 = vshrl.u32 %v1007, 7
        %v1009 = vsub.s32 %v1006, %v1008
        %v1010 = vrot.slane %v994, %v1009
        %v1011 = vcombine.high %v1003, %v1003
        %1012 = vrot.lane.b32.xlu0 %v1003, 127
        %v1013 = vpop.permute.xlu0 %1012
        %1014 = vrot.lane.b32.xlu0 %v1011, 127
        %v1015 = vpop.permute.xlu0 %1014
        %1016 = vrot.lane.b32.xlu0 %v1010, 127
        %v1017 = vpop.permute.xlu0 %1016
        %v1018 = vsel %vm514, %v1013, %v1015
        %v1019 = vsel %vm514, %v1015, %v1017
        %1022 = vst [vmem:[#allocation3] sm:$0xc] %v1018
        %1023 = vst [vmem:[#allocation3 + $0x8] sm:$0xc] %v1019
        %v1024 = vld [vmem:[#allocation2] sm:$0x3f]
        %v1026 = vcombine.high %v1024, %v1024
        %v1028 = vunpack.c.l.s4 1983009808
        %v1029 = vunpack.c.0.s8 %v1028
        %v1030 = vlaneseq
        %v1031 = vshrl.u32 %v1030, 7
        %v1032 = vsub.s32 %v1029, %v1031
        %v1033 = vrot.slane %v1024, %v1032
        %v1035 = vunpack.c.l.s4 1983009808
        %v1036 = vunpack.c.0.s8 %v1035
        %v1037 = vlaneseq
        %v1038 = vshrl.u32 %v1037, 7
        %v1039 = vsub.s32 %v1036, %v1038
        %v1040 = vrot.slane %v1026, %v1039
        %v1041 = vcombine.high %v1033, %v1033
        %1042 = vrot.lane.b32.xlu0 %v1033, 126
        %v1043 = vpop.permute.xlu0 %1042
        %1044 = vrot.lane.b32.xlu0 %v1041, 126
        %v1045 = vpop.permute.xlu0 %1044
        %1046 = vrot.lane.b32.xlu0 %v1040, 126
        %v1047 = vpop.permute.xlu0 %1046
        %v1048 = vsel %vm549, %v1043, %v1045
        %v1049 = vsel %vm549, %v1045, %v1047
        %v1052 = vsel %vm524, %v1048, 0.0
        %v1053 = vsel %vm525, %v1049, 0.0
        %v1056 = vrot.slane %v1052, 4
        %v1057 = vrot.slane %v1053, 4
        %1060 = vst [vmem:[#allocation3] sm:$0x30] %v1056
        %1061 = vst [vmem:[#allocation3 + $0x8] sm:$0x30] %v1057
        %v1062 = vld [vmem:[#allocation2] sm:$0x3f]
        %v1064 = vcombine.high %v1062, %v1062
        %v1066 = vunpack.c.l.s4 1983009808
        %v1067 = vunpack.c.0.s8 %v1066
        %v1068 = vlaneseq
        %v1069 = vshrl.u32 %v1068, 7
        %v1070 = vsub.s32 %v1067, %v1069
        %v1071 = vrot.slane %v1062, %v1070
        %v1073 = vunpack.c.l.s4 1983009808
        %v1074 = vunpack.c.0.s8 %v1073
        %v1075 = vlaneseq
        %v1076 = vshrl.u32 %v1075, 7
        %v1077 = vsub.s32 %v1074, %v1076
        %v1078 = vrot.slane %v1064, %v1077
        %v1079 = vcombine.high %v1071, %v1071
        %1080 = vrot.lane.b32.xlu0 %v1071, 112
        %v1081 = vpop.permute.xlu0 %1080
        %1082 = vrot.lane.b32.xlu0 %v1079, 112
        %v1083 = vpop.permute.xlu0 %1082
        %1084 = vrot.lane.b32.xlu0 %v1078, 112
        %v1085 = vpop.permute.xlu0 %1084
        %v1086 = vsel %vm588, %v1081, %v1083
        %v1087 = vsel %vm588, %v1083, %v1085
        %v1090 = vsel %vm473, %v1086, 0.0
        %v1091 = vsel %vm474, %v1087, 0.0
        %v1094 = vrot.slane %v1090, 2
        %v1095 = vrot.slane %v1091, 2
        %1098 = vst [vmem:[#allocation3] sm:$0xc0] %v1094
        %1099 = vst [vmem:[#allocation3 + $0x8] sm:$0xc0] %v1095
        %v1100 = vld [vmem:[#allocation2] sm:$0x3f]
        %v1102 = vcombine.high %v1100, %v1100
        %v1104 = vunpack.c.l.s4 1983009808
        %v1105 = vunpack.c.0.s8 %v1104
        %v1106 = vlaneseq
        %v1107 = vshrl.u32 %v1106, 7
        %v1108 = vsub.s32 %v1105, %v1107
        %v1109 = vrot.slane %v1100, %v1108
        %v1111 = vunpack.c.l.s4 1983009808
        %v1112 = vunpack.c.0.s8 %v1111
        %v1113 = vlaneseq
        %v1114 = vshrl.u32 %v1113, 7
        %v1115 = vsub.s32 %v1112, %v1114
        %v1116 = vrot.slane %v1102, %v1115
        %v1117 = vcombine.high %v1109, %v1109
        %1118 = vrot.lane.b32.xlu0 %v1109, 111
        %v1119 = vpop.permute.xlu0 %1118
        %1120 = vrot.lane.b32.xlu0 %v1117, 111
        %v1121 = vpop.permute.xlu0 %1120
        %1122 = vrot.lane.b32.xlu0 %v1116, 111
        %v1123 = vpop.permute.xlu0 %1122
        %v1124 = vsel %vm627, %v1119, %v1121
        %v1125 = vsel %vm627, %v1121, %v1123
        %1128 = vst [vmem:[#allocation3 + $0x10] sm:$0x3] %v1124
        %1129 = vst [vmem:[#allocation3 + $0x18] sm:$0x3] %v1125
        %v1130 = vld [vmem:[#allocation2] sm:$0x3f]
        %v1132 = vcombine.high %v1130, %v1130
        %v1134 = vunpack.c.l.s4 1983009808
        %v1135 = vunpack.c.0.s8 %v1134
        %v1136 = vlaneseq
        %v1137 = vshrl.u32 %v1136, 7
        %v1138 = vsub.s32 %v1135, %v1137
        %v1139 = vrot.slane %v1130, %v1138
        %v1141 = vunpack.c.l.s4 1983009808
        %v1142 = vunpack.c.0.s8 %v1141
        %v1143 = vlaneseq
        %v1144 = vshrl.u32 %v1143, 7
        %v1145 = vsub.s32 %v1142, %v1144
        %v1146 = vrot.slane %v1132, %v1145
        %v1147 = vcombine.high %v1139, %v1139
        %1148 = vrot.lane.b32.xlu0 %v1139, 110
        %v1149 = vpop.permute.xlu0 %1148
        %1150 = vrot.lane.b32.xlu0 %v1147, 110
        %v1151 = vpop.permute.xlu0 %1150
        %1152 = vrot.lane.b32.xlu0 %v1146, 110
        %v1153 = vpop.permute.xlu0 %1152
        %v1154 = vsel %vm658, %v1149, %v1151
        %v1155 = vsel %vm658, %v1151, %v1153
        %v1158 = vsel %vm524, %v1154, 0.0
        %v1159 = vsel %vm525, %v1155, 0.0
        %v1162 = vrot.slane %v1158, 6
        %v1163 = vrot.slane %v1159, 6
        %1166 = vst [vmem:[#allocation3 + $0x10] sm:$0xc] %v1162
        %1167 = vst [vmem:[#allocation3 + $0x18] sm:$0xc] %v1163
        %v1168 = vld [vmem:[#allocation2] sm:$0x3f]
        %v1170 = vcombine.high %v1168, %v1168
        %v1172 = vunpack.c.l.s4 1983009808
        %v1173 = vunpack.c.0.s8 %v1172
        %v1174 = vlaneseq
        %v1175 = vshrl.u32 %v1174, 7
        %v1176 = vsub.s32 %v1173, %v1175
        %v1177 = vrot.slane %v1168, %v1176
        %v1179 = vunpack.c.l.s4 1983009808
        %v1180 = vunpack.c.0.s8 %v1179
        %v1181 = vlaneseq
        %v1182 = vshrl.u32 %v1181, 7
        %v1183 = vsub.s32 %v1180, %v1182
        %v1184 = vrot.slane %v1170, %v1183
        %v1185 = vcombine.high %v1177, %v1177
        %1186 = vrot.lane.b32.xlu0 %v1177, 96
        %v1187 = vpop.permute.xlu0 %1186
        %1188 = vrot.lane.b32.xlu0 %v1185, 96
        %v1189 = vpop.permute.xlu0 %1188
        %1190 = vrot.lane.b32.xlu0 %v1184, 96
        %v1191 = vpop.permute.xlu0 %1190
        %v1192 = vsel %vm697, %v1187, %v1189
        %v1193 = vsel %vm697, %v1189, %v1191
        %v1196 = vsel %vm473, %v1192, 0.0
        %v1197 = vsel %vm474, %v1193, 0.0
        %v1200 = vrot.slane %v1196, 4
        %v1201 = vrot.slane %v1197, 4
        %1204 = vst [vmem:[#allocation3 + $0x10] sm:$0x30] %v1200
        %1205 = vst [vmem:[#allocation3 + $0x18] sm:$0x30] %v1201
        %v1206 = vld [vmem:[#allocation2] sm:$0x3f]
        %v1208 = vcombine.low %v1206, %v1206
        %v1210 = vunpack.c.l.s4 1983009808
        %v1211 = vunpack.c.0.s8 %v1210
        %v1212 = vlaneseq
        %v1213 = vshrl.u32 %v1212, 7
        %v1214 = vsub.s32 %v1211, %v1213
        %v1215 = vrot.slane %v1208, %v1214
        %v1217 = vunpack.c.l.s4 1983009808
        %v1218 = vunpack.c.0.s8 %v1217
        %v1219 = vlaneseq
        %v1220 = vshrl.u32 %v1219, 7
        %v1221 = vsub.s32 %v1218, %v1220
        %v1222 = vrot.slane %v1206, %v1221
        %v1223 = vcombine.low %v1215, %v1215
        %v1224 = vcombine.low %v1222, %v1222
        %1225 = vrot.lane.b32.xlu0 %v1223, 95
        %v1226 = vpop.permute.xlu0 %1225
        %1227 = vrot.lane.b32.xlu0 %v1215, 95
        %v1228 = vpop.permute.xlu0 %1227
        %1229 = vrot.lane.b32.xlu0 %v1224, 95
        %v1230 = vpop.permute.xlu0 %1229
        %v1231 = vsel %vm737, %v1226, %v1228
        %v1232 = vsel %vm737, %v1228, %v1230
        %1235 = vst [vmem:[#allocation3 + $0x10] sm:$0xc0] %v1231
        %1236 = vst [vmem:[#allocation3 + $0x18] sm:$0xc0] %v1232
        %v1237 = vld [vmem:[#allocation2] sm:$0x3f]
        %v1239 = vcombine.high %v1237, %v1237
        %v1241 = vunpack.c.l.s4 1983009808
        %v1242 = vunpack.c.0.s8 %v1241
        %v1243 = vlaneseq
        %v1244 = vshrl.u32 %v1243, 7
        %v1245 = vsub.s32 %v1242, %v1244
        %v1246 = vrot.slane %v1237, %v1245
        %v1248 = vunpack.c.l.s4 1983009808
        %v1249 = vunpack.c.0.s8 %v1248
        %v1250 = vlaneseq
        %v1251 = vshrl.u32 %v1250, 7
        %v1252 = vsub.s32 %v1249, %v1251
        %v1253 = vrot.slane %v1239, %v1252
        %v1254 = vcombine.high %v1246, %v1246
        %1255 = vrot.lane.b32.xlu0 %v1246, 94
        %v1256 = vpop.permute.xlu0 %1255
        %1257 = vrot.lane.b32.xlu0 %v1254, 94
        %v1258 = vpop.permute.xlu0 %1257
        %1259 = vrot.lane.b32.xlu0 %v1253, 94
        %v1260 = vpop.permute.xlu0 %1259
        %v1261 = vsel %vm768, %v1256, %v1258
        %v1262 = vsel %vm768, %v1258, %v1260
        %v1265 = vsel %vm524, %v1261, 0.0
        %v1266 = vsel %vm525, %v1262, 0.0
        %1267 = vst [vmem:[#allocation3 + $0x20] sm:$0x3] %v1265
        %1268 = vst [vmem:[#allocation3 + $0x28] sm:$0x3] %v1266
        %v1269 = vld [vmem:[%s5] sm:$0x3]
        %v1270 = vld [vmem:[#allocation3] sm:$0xff]
        %v1271 = vld [vmem:[#allocation3 + $0x8] sm:$0xff]
        %v1272 = vld [vmem:[#allocation3 + $0x10] sm:$0xff]
        %v1273 = vld [vmem:[#allocation3 + $0x18] sm:$0xff]
        %v1274 = vld [vmem:[#allocation3 + $0x20] sm:$0x3]
        %v1275 = vld [vmem:[#allocation3 + $0x28] sm:$0x3]
        %v1277 = vsel %vm784, %v1269, 0
        %v1280 = vsel %vm354, %v1274, 0
        %v1283 = vsel %vm354, %v1275, 0
        %1285 = vmatprep.subr.mxu0 %v1271
        %1286 = vmatpush1.msra.mxu0 %v1270
        %1287 = vmatprep.subr.mxu0 %v1273
        %1288 = vmatpush1.msra.mxu0 %v1272
        %1289 = vmatprep.subr.mxu0 %v1283
        %1290 = vmatpush1.msra.mxu0 %v1280
        %1291 = vmatprep.subr.mxu0 0.0
        %1292 = vmatpush1.msra.mxu0 0.0
        %1293 = vmatprep.subr.mxu0 0.0
        %1294 = vmatpush1.msra.mxu0 0.0
        %1295 = vmatprep.subr.mxu0 0.0
        %1296 = vmatpush1.msra.mxu0 0.0
        %1297 = vmatprep.subr.mxu0 0.0
        %1298 = vmatpush1.msra.mxu0 0.0
        %1299 = vmatprep.subr.mxu0 0.0
        %1300 = vmatpush1.msra.mxu0 0.0
        %1301 = vmatprep.subr.mxu0 0.0
        %1302 = vmatpush1.msra.mxu0 0.0
        %1303 = vmatprep.subr.mxu0 0.0
        %1304 = vmatpush1.msra.mxu0 0.0
        %1305 = vmatprep.subr.mxu0 0.0
        %1306 = vmatpush1.msra.mxu0 0.0
        %1307 = vmatprep.subr.mxu0 0.0
        %1308 = vmatpush1.msra.mxu0 0.0
        %1309 = vmatprep.subr.mxu0 0.0
        %1310 = vmatpush1.msra.mxu0 0.0
        %1311 = vmatprep.subr.mxu0 0.0
        %1312 = vmatpush1.msra.mxu0 0.0
        %1313 = vmatprep.subr.mxu0 0.0
        %1314 = vmatpush1.msra.mxu0 0.0
        %1315 = vmatprep.subr.mxu0 0.0
        %1316 = vmatpush1.msra.mxu0 0.0
        %1317 = vmatprep.subr.mxu0 0.0
        %1318 = vmatpush1.msra.mxu0 0.0
        %1319 = vmatprep.subr.mxu0 0.0
        %1320 = vmatpush1.msra.mxu0 0.0
        %1321 = vmatprep.subr.mxu0 0.0
        %1322 = vmatpush1.msra.mxu0 0.0
        %1323 = vmatprep.subr.mxu0 0.0
        %1324 = vmatpush1.msra.mxu0 0.0
        %1325 = vmatprep.subr.mxu0 0.0
        %1326 = vmatpush1.msra.mxu0 0.0
        %1327 = vmatprep.subr.mxu0 0.0
        %1328 = vmatpush1.msra.mxu0 0.0
        %1329 = vmatprep.subr.mxu0 0.0
        %1330 = vmatpush1.msra.mxu0 0.0
        %1331 = vmatprep.subr.mxu0 0.0
        %1332 = vmatpush1.msra.mxu0 0.0
        %1333 = vmatprep.subr.mxu0 0.0
        %1334 = vmatpush1.msra.mxu0 0.0
        %1335 = vmatprep.subr.mxu0 0.0
        %1336 = vmatpush1.msra.mxu0 0.0
        %1337 = vmatprep.subr.mxu0 0.0
        %1338 = vmatpush1.msra.mxu0 0.0
        %1339 = vmatprep.subr.mxu0 0.0
        %1340 = vmatpush1.msra.mxu0 0.0
        %1341 = vmatprep.subr.mxu0 0.0
        %1342 = vmatpush1.msra.mxu0 0.0
        %1343 = vmatprep.subr.mxu0 0.0
        %1344 = vmatpush1.msra.mxu0 0.0
        %1345 = vmatprep.subr.mxu0 0.0
        %1346 = vmatpush1.msra.mxu0 0.0
        %1347 = vmatprep.subr.mxu0 0.0
        %1348 = vmatpush1.msra.mxu0 0.0
        %1349 = vmatprep.mubr.f32.mxu0 0.0
        %1350 = vmatmul.mubr.f32.gmra.mrb[0].mxu0 %v1277
        %v1351 = vpop.f32.mrb[0].mxu0
        %v1352 = vadd.f32 0.0, %v1351
        %v1353 = vpop.f32.mrb[0].mxu0
        %v1354 = vadd.f32 0.0, %v1353
        %1355 = vdwg.mxu0
        %v1356 = vmul.f32 %v1352, %v968
        %v1357 = vmul.f32 %v1354, %v970
        %v1360 = vcombine.low %v1356, %v1357
        %v1362 = vunpack.c.l.s4 1983009808
        %v1363 = vunpack.c.0.s8 %v1362
        %v1364 = vlaneseq
        %v1365 = vshrl.u32 %v1364, 7
        %v1366 = vsub.s32 %v1363, %v1365
        %v1367 = vrot.slane %v1360, %v1366
        %1368 = vrot.lane.b32.xlu0 %v1367, 17
        %v1369 = vpop.permute.xlu0 %1368
        %v1370 = vrot.slane %v1369, 6
        %v1371 = vsel %vm462, %v1370, %v1369
        %1373 = vst.msk [vmem:[#allocation2] sm:$0x3f] %vm468, %v1371
        %v1374 = vld [vmem:[#allocation2] sm:$0xf]
        %v1377 = vunpack.c.l.s4 1983009808
        %v1378 = vunpack.c.0.s8 %v1377
        %v1379 = vlaneseq
        %v1380 = vshrl.u32 %v1379, 7
        %v1381 = vsub.s32 %v1378, %v1380
        %v1382 = vrot.slane %v1374, %v1381
        %v1383 = vcombine.high %v1382, %v1382
        %v1386 = vsel %vm473, %v1382, 0.0
        %v1387 = vsel %vm474, %v1383, 0.0
        %1388 = vst [vmem:[#allocation3] sm:$0x3] %v1386
        %1389 = vst [vmem:[#allocation3 + $0x8] sm:$0x3] %v1387
        %v1390 = vld [vmem:[#allocation2] sm:$0x3f]
        %v1392 = vcombine.low %v1390, %v1390
        %v1394 = vunpack.c.l.s4 1983009808
        %v1395 = vunpack.c.0.s8 %v1394
        %v1396 = vlaneseq
        %v1397 = vshrl.u32 %v1396, 7
        %v1398 = vsub.s32 %v1395, %v1397
        %v1399 = vrot.slane %v1392, %v1398
        %v1401 = vunpack.c.l.s4 1983009808
        %v1402 = vunpack.c.0.s8 %v1401
        %v1403 = vlaneseq
        %v1404 = vshrl.u32 %v1403, 7
        %v1405 = vsub.s32 %v1402, %v1404
        %v1406 = vrot.slane %v1390, %v1405
        %v1407 = vcombine.high %v1399, %v1399
        %1408 = vrot.lane.b32.xlu0 %v1399, 127
        %v1409 = vpop.permute.xlu0 %1408
        %1410 = vrot.lane.b32.xlu0 %v1407, 127
        %v1411 = vpop.permute.xlu0 %1410
        %1412 = vrot.lane.b32.xlu0 %v1406, 127
        %v1413 = vpop.permute.xlu0 %1412
        %v1414 = vsel %vm514, %v1409, %v1411
        %v1415 = vsel %vm514, %v1411, %v1413
        %1418 = vst [vmem:[#allocation3] sm:$0xc] %v1414
        %1419 = vst [vmem:[#allocation3 + $0x8] sm:$0xc] %v1415
        %v1420 = vld [vmem:[#allocation2] sm:$0x3f]
        %v1422 = vcombine.high %v1420, %v1420
        %v1424 = vunpack.c.l.s4 1983009808
        %v1425 = vunpack.c.0.s8 %v1424
        %v1426 = vlaneseq
        %v1427 = vshrl.u32 %v1426, 7
        %v1428 = vsub.s32 %v1425, %v1427
        %v1429 = vrot.slane %v1420, %v1428
        %v1431 = vunpack.c.l.s4 1983009808
        %v1432 = vunpack.c.0.s8 %v1431
        %v1433 = vlaneseq
        %v1434 = vshrl.u32 %v1433, 7
        %v1435 = vsub.s32 %v1432, %v1434
        %v1436 = vrot.slane %v1422, %v1435
        %v1437 = vcombine.high %v1429, %v1429
        %1438 = vrot.lane.b32.xlu0 %v1429, 126
        %v1439 = vpop.permute.xlu0 %1438
        %1440 = vrot.lane.b32.xlu0 %v1437, 126
        %v1441 = vpop.permute.xlu0 %1440
        %1442 = vrot.lane.b32.xlu0 %v1436, 126
        %v1443 = vpop.permute.xlu0 %1442
        %v1444 = vsel %vm549, %v1439, %v1441
        %v1445 = vsel %vm549, %v1441, %v1443
        %v1448 = vsel %vm524, %v1444, 0.0
        %v1449 = vsel %vm525, %v1445, 0.0
        %v1452 = vrot.slane %v1448, 4
        %v1453 = vrot.slane %v1449, 4
        %1456 = vst [vmem:[#allocation3] sm:$0x30] %v1452
        %1457 = vst [vmem:[#allocation3 + $0x8] sm:$0x30] %v1453
        %v1458 = vld [vmem:[#allocation2] sm:$0x3f]
        %v1460 = vcombine.high %v1458, %v1458
        %v1462 = vunpack.c.l.s4 1983009808
        %v1463 = vunpack.c.0.s8 %v1462
        %v1464 = vlaneseq
        %v1465 = vshrl.u32 %v1464, 7
        %v1466 = vsub.s32 %v1463, %v1465
        %v1467 = vrot.slane %v1458, %v1466
        %v1469 = vunpack.c.l.s4 1983009808
        %v1470 = vunpack.c.0.s8 %v1469
        %v1471 = vlaneseq
        %v1472 = vshrl.u32 %v1471, 7
        %v1473 = vsub.s32 %v1470, %v1472
        %v1474 = vrot.slane %v1460, %v1473
        %v1475 = vcombine.high %v1467, %v1467
        %1476 = vrot.lane.b32.xlu0 %v1467, 112
        %v1477 = vpop.permute.xlu0 %1476
        %1478 = vrot.lane.b32.xlu0 %v1475, 112
        %v1479 = vpop.permute.xlu0 %1478
        %1480 = vrot.lane.b32.xlu0 %v1474, 112
        %v1481 = vpop.permute.xlu0 %1480
        %v1482 = vsel %vm588, %v1477, %v1479
        %v1483 = vsel %vm588, %v1479, %v1481
        %v1486 = vsel %vm473, %v1482, 0.0
        %v1487 = vsel %vm474, %v1483, 0.0
        %v1490 = vrot.slane %v1486, 2
        %v1491 = vrot.slane %v1487, 2
        %1494 = vst [vmem:[#allocation3] sm:$0xc0] %v1490
        %1495 = vst [vmem:[#allocation3 + $0x8] sm:$0xc0] %v1491
        %v1496 = vld [vmem:[#allocation2] sm:$0x3f]
        %v1498 = vcombine.high %v1496, %v1496
        %v1500 = vunpack.c.l.s4 1983009808
        %v1501 = vunpack.c.0.s8 %v1500
        %v1502 = vlaneseq
        %v1503 = vshrl.u32 %v1502, 7
        %v1504 = vsub.s32 %v1501, %v1503
        %v1505 = vrot.slane %v1496, %v1504
        %v1507 = vunpack.c.l.s4 1983009808
        %v1508 = vunpack.c.0.s8 %v1507
        %v1509 = vlaneseq
        %v1510 = vshrl.u32 %v1509, 7
        %v1511 = vsub.s32 %v1508, %v1510
        %v1512 = vrot.slane %v1498, %v1511
        %v1513 = vcombine.high %v1505, %v1505
        %1514 = vrot.lane.b32.xlu0 %v1505, 111
        %v1515 = vpop.permute.xlu0 %1514
        %1516 = vrot.lane.b32.xlu0 %v1513, 111
        %v1517 = vpop.permute.xlu0 %1516
        %1518 = vrot.lane.b32.xlu0 %v1512, 111
        %v1519 = vpop.permute.xlu0 %1518
        %v1520 = vsel %vm627, %v1515, %v1517
        %v1521 = vsel %vm627, %v1517, %v1519
        %1524 = vst [vmem:[#allocation3 + $0x10] sm:$0x3] %v1520
        %1525 = vst [vmem:[#allocation3 + $0x18] sm:$0x3] %v1521
        %v1526 = vld [vmem:[#allocation2] sm:$0x3f]
        %v1528 = vcombine.high %v1526, %v1526
        %v1530 = vunpack.c.l.s4 1983009808
        %v1531 = vunpack.c.0.s8 %v1530
        %v1532 = vlaneseq
        %v1533 = vshrl.u32 %v1532, 7
        %v1534 = vsub.s32 %v1531, %v1533
        %v1535 = vrot.slane %v1526, %v1534
        %v1537 = vunpack.c.l.s4 1983009808
        %v1538 = vunpack.c.0.s8 %v1537
        %v1539 = vlaneseq
        %v1540 = vshrl.u32 %v1539, 7
        %v1541 = vsub.s32 %v1538, %v1540
        %v1542 = vrot.slane %v1528, %v1541
        %v1543 = vcombine.high %v1535, %v1535
        %1544 = vrot.lane.b32.xlu0 %v1535, 110
        %v1545 = vpop.permute.xlu0 %1544
        %1546 = vrot.lane.b32.xlu0 %v1543, 110
        %v1547 = vpop.permute.xlu0 %1546
        %1548 = vrot.lane.b32.xlu0 %v1542, 110
        %v1549 = vpop.permute.xlu0 %1548
        %v1550 = vsel %vm658, %v1545, %v1547
        %v1551 = vsel %vm658, %v1547, %v1549
        %v1554 = vsel %vm524, %v1550, 0.0
        %v1555 = vsel %vm525, %v1551, 0.0
        %v1558 = vrot.slane %v1554, 6
        %v1559 = vrot.slane %v1555, 6
        %1562 = vst [vmem:[#allocation3 + $0x10] sm:$0xc] %v1558
        %1563 = vst [vmem:[#allocation3 + $0x18] sm:$0xc] %v1559
        %v1564 = vld [vmem:[#allocation2] sm:$0x3f]
        %v1566 = vcombine.high %v1564, %v1564
        %v1568 = vunpack.c.l.s4 1983009808
        %v1569 = vunpack.c.0.s8 %v1568
        %v1570 = vlaneseq
        %v1571 = vshrl.u32 %v1570, 7
        %v1572 = vsub.s32 %v1569, %v1571
        %v1573 = vrot.slane %v1564, %v1572
        %v1575 = vunpack.c.l.s4 1983009808
        %v1576 = vunpack.c.0.s8 %v1575
        %v1577 = vlaneseq
        %v1578 = vshrl.u32 %v1577, 7
        %v1579 = vsub.s32 %v1576, %v1578
        %v1580 = vrot.slane %v1566, %v1579
        %v1581 = vcombine.high %v1573, %v1573
        %1582 = vrot.lane.b32.xlu0 %v1573, 96
        %v1583 = vpop.permute.xlu0 %1582
        %1584 = vrot.lane.b32.xlu0 %v1581, 96
        %v1585 = vpop.permute.xlu0 %1584
        %1586 = vrot.lane.b32.xlu0 %v1580, 96
        %v1587 = vpop.permute.xlu0 %1586
        %v1588 = vsel %vm697, %v1583, %v1585
        %v1589 = vsel %vm697, %v1585, %v1587
        %v1592 = vsel %vm473, %v1588, 0.0
        %v1593 = vsel %vm474, %v1589, 0.0
        %v1596 = vrot.slane %v1592, 4
        %v1597 = vrot.slane %v1593, 4
        %1600 = vst [vmem:[#allocation3 + $0x10] sm:$0x30] %v1596
        %1601 = vst [vmem:[#allocation3 + $0x18] sm:$0x30] %v1597
        %v1602 = vld [vmem:[#allocation2] sm:$0x3f]
        %v1604 = vcombine.low %v1602, %v1602
        %v1606 = vunpack.c.l.s4 1983009808
        %v1607 = vunpack.c.0.s8 %v1606
        %v1608 = vlaneseq
        %v1609 = vshrl.u32 %v1608, 7
        %v1610 = vsub.s32 %v1607, %v1609
        %v1611 = vrot.slane %v1604, %v1610
        %v1613 = vunpack.c.l.s4 1983009808
        %v1614 = vunpack.c.0.s8 %v1613
        %v1615 = vlaneseq
        %v1616 = vshrl.u32 %v1615, 7
        %v1617 = vsub.s32 %v1614, %v1616
        %v1618 = vrot.slane %v1602, %v1617
        %v1619 = vcombine.low %v1611, %v1611
        %v1620 = vcombine.low %v1618, %v1618
        %1621 = vrot.lane.b32.xlu0 %v1619, 95
        %v1622 = vpop.permute.xlu0 %1621
        %1623 = vrot.lane.b32.xlu0 %v1611, 95
        %v1624 = vpop.permute.xlu0 %1623
        %1625 = vrot.lane.b32.xlu0 %v1620, 95
        %v1626 = vpop.permute.xlu0 %1625
        %v1627 = vsel %vm737, %v1622, %v1624
        %v1628 = vsel %vm737, %v1624, %v1626
        %1631 = vst [vmem:[#allocation3 + $0x10] sm:$0xc0] %v1627
        %1632 = vst [vmem:[#allocation3 + $0x18] sm:$0xc0] %v1628
        %v1633 = vld [vmem:[#allocation2] sm:$0x3f]
        %v1635 = vcombine.high %v1633, %v1633
        %v1637 = vunpack.c.l.s4 1983009808
        %v1638 = vunpack.c.0.s8 %v1637
        %v1639 = vlaneseq
        %v1640 = vshrl.u32 %v1639, 7
        %v1641 = vsub.s32 %v1638, %v1640
        %v1642 = vrot.slane %v1633, %v1641
        %v1644 = vunpack.c.l.s4 1983009808
        %v1645 = vunpack.c.0.s8 %v1644
        %v1646 = vlaneseq
        %v1647 = vshrl.u32 %v1646, 7
        %v1648 = vsub.s32 %v1645, %v1647
        %v1649 = vrot.slane %v1635, %v1648
        %v1650 = vcombine.high %v1642, %v1642
        %1651 = vrot.lane.b32.xlu0 %v1642, 94
        %v1652 = vpop.permute.xlu0 %1651
        %1653 = vrot.lane.b32.xlu0 %v1650, 94
        %v1654 = vpop.permute.xlu0 %1653
        %1655 = vrot.lane.b32.xlu0 %v1649, 94
        %v1656 = vpop.permute.xlu0 %1655
        %v1657 = vsel %vm768, %v1652, %v1654
        %v1658 = vsel %vm768, %v1654, %v1656
        %v1661 = vsel %vm524, %v1657, 0.0
        %v1662 = vsel %vm525, %v1658, 0.0
        %1663 = vst [vmem:[#allocation3 + $0x20] sm:$0x3] %v1661
        %1664 = vst [vmem:[#allocation3 + $0x28] sm:$0x3] %v1662
        %v1665 = vld [vmem:[%s6] sm:$0x3]
        %v1666 = vld [vmem:[#allocation3] sm:$0xff]
        %v1667 = vld [vmem:[#allocation3 + $0x8] sm:$0xff]
        %v1668 = vld [vmem:[#allocation3 + $0x10] sm:$0xff]
        %v1669 = vld [vmem:[#allocation3 + $0x18] sm:$0xff]
        %v1670 = vld [vmem:[#allocation3 + $0x20] sm:$0x3]
        %v1671 = vld [vmem:[#allocation3 + $0x28] sm:$0x3]
        %v1673 = vsel %vm784, %v1665, 0
        %v1676 = vsel %vm354, %v1670, 0
        %v1679 = vsel %vm354, %v1671, 0
        %1681 = vmatprep.subr.mxu0 %v1667
        %1682 = vmatpush1.msra.mxu0 %v1666
        %1683 = vmatprep.subr.mxu0 %v1669
        %1684 = vmatpush1.msra.mxu0 %v1668
        %1685 = vmatprep.subr.mxu0 %v1679
        %1686 = vmatpush1.msra.mxu0 %v1676
        %1687 = vmatprep.subr.mxu0 0.0
        %1688 = vmatpush1.msra.mxu0 0.0
        %1689 = vmatprep.subr.mxu0 0.0
        %1690 = vmatpush1.msra.mxu0 0.0
        %1691 = vmatprep.subr.mxu0 0.0
        %1692 = vmatpush1.msra.mxu0 0.0
        %1693 = vmatprep.subr.mxu0 0.0
        %1694 = vmatpush1.msra.mxu0 0.0
        %1695 = vmatprep.subr.mxu0 0.0
        %1696 = vmatpush1.msra.mxu0 0.0
        %1697 = vmatprep.subr.mxu0 0.0
        %1698 = vmatpush1.msra.mxu0 0.0
        %1699 = vmatprep.subr.mxu0 0.0
        %1700 = vmatpush1.msra.mxu0 0.0
        %1701 = vmatprep.subr.mxu0 0.0
        %1702 = vmatpush1.msra.mxu0 0.0
        %1703 = vmatprep.subr.mxu0 0.0
        %1704 = vmatpush1.msra.mxu0 0.0
        %1705 = vmatprep.subr.mxu0 0.0
        %1706 = vmatpush1.msra.mxu0 0.0
        %1707 = vmatprep.subr.mxu0 0.0
        %1708 = vmatpush1.msra.mxu0 0.0
        %1709 = vmatprep.subr.mxu0 0.0
        %1710 = vmatpush1.msra.mxu0 0.0
        %1711 = vmatprep.subr.mxu0 0.0
        %1712 = vmatpush1.msra.mxu0 0.0
        %1713 = vmatprep.subr.mxu0 0.0
        %1714 = vmatpush1.msra.mxu0 0.0
        %1715 = vmatprep.subr.mxu0 0.0
        %1716 = vmatpush1.msra.mxu0 0.0
        %1717 = vmatprep.subr.mxu0 0.0
        %1718 = vmatpush1.msra.mxu0 0.0
        %1719 = vmatprep.subr.mxu0 0.0
        %1720 = vmatpush1.msra.mxu0 0.0
        %1721 = vmatprep.subr.mxu0 0.0
        %1722 = vmatpush1.msra.mxu0 0.0
        %1723 = vmatprep.subr.mxu0 0.0
        %1724 = vmatpush1.msra.mxu0 0.0
        %1725 = vmatprep.subr.mxu0 0.0
        %1726 = vmatpush1.msra.mxu0 0.0
        %1727 = vmatprep.subr.mxu0 0.0
        %1728 = vmatpush1.msra.mxu0 0.0
        %1729 = vmatprep.subr.mxu0 0.0
        %1730 = vmatpush1.msra.mxu0 0.0
        %1731 = vmatprep.subr.mxu0 0.0
        %1732 = vmatpush1.msra.mxu0 0.0
        %1733 = vmatprep.subr.mxu0 0.0
        %1734 = vmatpush1.msra.mxu0 0.0
        %1735 = vmatprep.subr.mxu0 0.0
        %1736 = vmatpush1.msra.mxu0 0.0
        %1737 = vmatprep.subr.mxu0 0.0
        %1738 = vmatpush1.msra.mxu0 0.0
        %1739 = vmatprep.subr.mxu0 0.0
        %1740 = vmatpush1.msra.mxu0 0.0
        %1741 = vmatprep.subr.mxu0 0.0
        %1742 = vmatpush1.msra.mxu0 0.0
        %1743 = vmatprep.subr.mxu0 0.0
        %1744 = vmatpush1.msra.mxu0 0.0
        %1745 = vmatprep.mubr.f32.mxu0 0.0
        %1746 = vmatmul.mubr.f32.gmra.mrb[0].mxu0 %v1673
        %v1747 = vpop.f32.mrb[0].mxu0
        %v1748 = vadd.f32 0.0, %v1747
        %v1749 = vpop.f32.mrb[0].mxu0
        %v1750 = vadd.f32 0.0, %v1749
        %1751 = vdwg.mxu0
        %vm1752 = vcmp.ge.f32.partialorder %v1748, 0.0
        %vm1753 = vcmp.ge.f32.partialorder %v1750, 0.0
        %v1754 = vmul.f32 %v1748, 0.2
        %v1755 = vmul.f32 %v1750, 0.2
        %v1756 = vsel %vm1752, %v1748, %v1754
        %v1757 = vsel %vm1753, %v1750, %v1755
        %1758 = vst [vmem:[#allocation3] sm:$0x3] %v869
        %1759 = vst [vmem:[#allocation3 + $0x8] sm:$0x3] %v870
        %v1762 = vrot.slane %v1756, 6
        %v1763 = vrot.slane %v1757, 6
        %1766 = vst [vmem:[#allocation3] sm:$0xc] %v1762
        %1767 = vst [vmem:[#allocation3 + $0x8] sm:$0xc] %v1763
        %v1768 = vld [vmem:[%s7] sm:$0xf]
        %v1769 = vld [vmem:[#allocation3] sm:$0xf]
        %v1770 = vld [vmem:[#allocation3 + $0x8] sm:$0xf]
        %v1773 = vsel %vm363, %v1768, 0
        %v1776 = vsel %vm367, %v1769, 0
        %v1779 = vsel %vm367, %v1770, 0
        %1781 = vmatprep.subr.mxu0 %v1779
        %1782 = vmatpush1.msra.mxu0 %v1776
        %1783 = vmatprep.subr.mxu0 0.0
        %1784 = vmatpush1.msra.mxu0 0.0
        %1785 = vmatprep.subr.mxu0 0.0
        %1786 = vmatpush1.msra.mxu0 0.0
        %1787 = vmatprep.subr.mxu0 0.0
        %1788 = vmatpush1.msra.mxu0 0.0
        %1789 = vmatprep.subr.mxu0 0.0
        %1790 = vmatpush1.msra.mxu0 0.0
        %1791 = vmatprep.subr.mxu0 0.0
        %1792 = vmatpush1.msra.mxu0 0.0
        %1793 = vmatprep.subr.mxu0 0.0
        %1794 = vmatpush1.msra.mxu0 0.0
        %1795 = vmatprep.subr.mxu0 0.0
        %1796 = vmatpush1.msra.mxu0 0.0
        %1797 = vmatprep.subr.mxu0 0.0
        %1798 = vmatpush1.msra.mxu0 0.0
        %1799 = vmatprep.subr.mxu0 0.0
        %1800 = vmatpush1.msra.mxu0 0.0
        %1801 = vmatprep.subr.mxu0 0.0
        %1802 = vmatpush1.msra.mxu0 0.0
        %1803 = vmatprep.subr.mxu0 0.0
        %1804 = vmatpush1.msra.mxu0 0.0
        %1805 = vmatprep.subr.mxu0 0.0
        %1806 = vmatpush1.msra.mxu0 0.0
        %1807 = vmatprep.subr.mxu0 0.0
        %1808 = vmatpush1.msra.mxu0 0.0
        %1809 = vmatprep.subr.mxu0 0.0
        %1810 = vmatpush1.msra.mxu0 0.0
        %1811 = vmatprep.subr.mxu0 0.0
        %1812 = vmatpush1.msra.mxu0 0.0
        %1813 = vmatprep.subr.mxu0 0.0
        %1814 = vmatpush1.msra.mxu0 0.0
        %1815 = vmatprep.subr.mxu0 0.0
        %1816 = vmatpush1.msra.mxu0 0.0
        %1817 = vmatprep.subr.mxu0 0.0
        %1818 = vmatpush1.msra.mxu0 0.0
        %1819 = vmatprep.subr.mxu0 0.0
        %1820 = vmatpush1.msra.mxu0 0.0
        %1821 = vmatprep.subr.mxu0 0.0
        %1822 = vmatpush1.msra.mxu0 0.0
        %1823 = vmatprep.subr.mxu0 0.0
        %1824 = vmatpush1.msra.mxu0 0.0
        %1825 = vmatprep.subr.mxu0 0.0
        %1826 = vmatpush1.msra.mxu0 0.0
        %1827 = vmatprep.subr.mxu0 0.0
        %1828 = vmatpush1.msra.mxu0 0.0
        %1829 = vmatprep.subr.mxu0 0.0
        %1830 = vmatpush1.msra.mxu0 0.0
        %1831 = vmatprep.subr.mxu0 0.0
        %1832 = vmatpush1.msra.mxu0 0.0
        %1833 = vmatprep.subr.mxu0 0.0
        %1834 = vmatpush1.msra.mxu0 0.0
        %1835 = vmatprep.subr.mxu0 0.0
        %1836 = vmatpush1.msra.mxu0 0.0
        %1837 = vmatprep.subr.mxu0 0.0
        %1838 = vmatpush1.msra.mxu0 0.0
        %1839 = vmatprep.subr.mxu0 0.0
        %1840 = vmatpush1.msra.mxu0 0.0
        %1841 = vmatprep.subr.mxu0 0.0
        %1842 = vmatpush1.msra.mxu0 0.0
        %1843 = vmatprep.subr.mxu0 0.0
        %1844 = vmatpush1.msra.mxu0 0.0
        %1845 = vmatprep.mubr.f32.mxu0 0.0
        %1846 = vmatmul.mubr.f32.gmra.mrb[0].mxu0 %v1773
        %v1847 = vpop.f32.mrb[0].mxu0
        %v1848 = vadd.f32 %v322, %v1847
        %v1849 = vpop.f32.mrb[0].mxu0
        %v1850 = vadd.f32 %v362, %v1849
        %1851 = vdwg.mxu0
        %v1854 = vcombine.low %v1848, %v1850
        %1856 = vst [vmem:[%s321] sm:$0xff] %v1854
        %s1857 = sand.u32 %s206, 1
        %s1858 = scalar_lea.sflag [#allocation6], %s1857
        %s1859 = sand.u32 %s206, 1
        %s1860 = smul.addr %s1859, 8
        %s1861 = scalar_lea.vmem [#allocation7], %s1860
        // Predicated region
        $region57: #{tpu_custom_call.1} parent=51 // pred_check
          %p1862 = pneg %p216
        $region58: #{tpu_custom_call.1} parent=51 // pred_check_branch
          %1864 = sbr.rel (%p1862) target = $region60
        $region59: #{tpu_custom_call.1} parent=51 // pred_region
          %s1866 = ssub.s32 128, 128
          %1867 = vsyncadd %s1858, %s1866
          %s1868 = smul.addr %s25, 2
          %s1869 = smul.addr %s1868, 64
          %s1870 = scalar_lea.hbm %s8, %s1869
          %s1872 = sshll.u32 %s1861, 4
          %s1873 = int_to_ptr.vmem [resolvable:$true] %s1872
          %1875 = dma.vmem_to_hbm [thread:$0]  %s1873, 128, %s1870, %s1858
        $region60: #{tpu_custom_call.1} parent=51 // pred_fallthru
          _
      $region52: #{tpu_custom_call.1} parent=5 // pred_fallthru
        _
      %p1876 = scmp.le.s32.totalorder 2, %s20
      // Predicated region
      $region61: #{tpu_custom_call.1} parent=5 // pred_check
        %p1877 = pneg %p1876
      $region62: #{tpu_custom_call.1} parent=5 // pred_check_branch
        %1879 = sbr.rel (%p1877) target = $region64
      $region63: #{tpu_custom_call.1} parent=5 // pred_region
        %s1880 = ssub.s32 %s20, 2
        // Predicated region
        $region65: #{tpu_custom_call.1} parent=63 // pred_check
          %p1881 = pneg %p222
        $region66: #{tpu_custom_call.1} parent=63 // pred_check_branch
          %1883 = sbr.rel (%p1881) target = $region68
        $region67: #{tpu_custom_call.1} parent=63 // pred_region
          %s1884 = sand.u32 %s207, 1
          %s1885 = scalar_lea.sflag [#allocation6], %s1884
          %s1886 = sand.u32 %s207, 1
          %s1887 = smul.addr %s1886, 8
          %s1888 = scalar_lea.vmem [#allocation7], %s1887
          %1889 = dma.done %s1885, 128
        $region68: #{tpu_custom_call.1} parent=63 // pred_fallthru
          _
      $region64: #{tpu_custom_call.1} parent=5 // pred_fallthru
        _
    $region6: #{tpu_custom_call.1} parent=1 // loop_footer
      %s24 = sadd.s32 1, %s20
    $region7: #{tpu_custom_call.1} parent=1 // loop_footer_branch
      %19 = sbr.rel target = $region3
    $region8: #{tpu_custom_call.1} parent=1 // loop_exit
      _
    %1890 = vsyncpa [#allocation5], 1
    %s1891 = scalar_lea.sflag [#allocation5], 1
    %1892 = vsyncpa %s1891, 1
    %1893 = vsyncpa [#allocation6], 1
    %s1894 = scalar_lea.sflag [#allocation6], 1
    %1895 = vsyncpa %s1894, 1

</llo_original>
